<compile_context>
chip_gen: v5e
topology: v5e:2x2
jax: 0.10.0
libtpu: 0.0.40
codegen_flags: <defaults>
</compile_context>

<pallas_src>
import functools

import jax
import jax.numpy as jnp
from jax import lax
from jax.experimental import pallas as pl
from jax.experimental.pallas import tpu as pltpu


def _default_elementwise_dtype(compute_dtype):
    """bf16 bias/ReLU only where the VPU has bf16 ALUs (v6e/v7x); f32 otherwise."""
    if jnp.dtype(compute_dtype) == jnp.dtype(jnp.float32):
        return jnp.float32
    try:
        kind = jax.devices()[0].device_kind.lower()
    except Exception:
        kind = ""
    if any(t in kind for t in ("v2", "v3", "v4", "v5")):
        return jnp.float32
    return compute_dtype


def _make_mlp_kernel(compute_dtype, elementwise_dtype, len_y):
    def to_compute(z):
        return z if z.dtype == compute_dtype else z.astype(compute_dtype)

    def mlp_kernel(x_ref, w0_ref, b0_ref, w1_ref, b1_ref, w2_ref, b2_ref,
                   w3_ref, b3_ref, o_ref):
        # x_ref: (batch_tile, len_x) in the input dtype (f32); cast in-kernel.
        xc = x_ref[...].astype(compute_dtype)

        # Layer 0: contract len_x (axis 1 of both) -> (hidden, batch_tile);
        # batch lands on the lane axis and stays there for the whole network.
        z = lax.dot_general(w0_ref[...], xc,
                            dimension_numbers=(((1,), (1,)), ((), ())),
                            preferred_element_type=elementwise_dtype)
        z = jnp.maximum(z + b0_ref[...], 0.0)

        z = jnp.dot(w1_ref[...], to_compute(z),
                    preferred_element_type=elementwise_dtype)
        z = jnp.maximum(z + b1_ref[...], 0.0)

        z = jnp.dot(w2_ref[...], to_compute(z),
                    preferred_element_type=elementwise_dtype)
        z = jnp.maximum(z + b2_ref[...], 0.0)            # (hidden, batch_tile)

        if len_y == 1:
            # N=1 output: skip a 1-column MXU matmul; VPU multiply + sublane
            # reduce in f32 gives a lane-dense (1, batch_tile) row directly.
            y = jnp.sum(z.astype(jnp.float32) * w3_ref[...].astype(jnp.float32),
                        axis=0, keepdims=True) + b3_ref[...]
        else:
            y = lax.dot_general(w3_ref[...], to_compute(z),
                                dimension_numbers=(((0,), (0,)), ((), ())),
                                preferred_element_type=jnp.float32) + b3_ref[...]

        o_ref[...] = y.astype(o_ref.dtype)

    return mlp_kernel


def performance_estimator_forward(x, params, *, batch_tile=4096,
                                  compute_dtype=jnp.bfloat16,
                                  elementwise_dtype=None):
    """x: (B, len_x) float32. params: PyTorch-layout dict (w: (out, in), b: (out,))."""
    B, len_x = x.shape
    hidden = params["w0"].shape[0]
    len_y = params["w3"].shape[0]

    if elementwise_dtype is None:
        elementwise_dtype = _default_elementwise_dtype(compute_dtype)

    round_up = lambda v, m: ((v + m - 1) // m) * m
    # Batch maps onto the lane axis -> tile must be a multiple of 128.  Large
    # tiles amortize per-grid-step overhead; cap so the grid keeps >= 2 steps
    # whenever possible (v7x megacore uses the "parallel" axis to split cores).
    desired = max(128, round_up(batch_tile, 128))
    half = max(128, round_up(pl.cdiv(B, 2), 128))
    batch_tile = min(desired, half)
    num_tiles = pl.cdiv(B, batch_tile)
    b_pad = num_tiles * batch_tile

    # Pad the batch only when needed; no separate XLA cast/transpose pass.
    x_p = x if b_pad == B else jnp.pad(x, ((0, b_pad - B), (0, 0)))

    w0 = params["w0"].astype(compute_dtype)              # (h, len_x)
    w1 = params["w1"].astype(compute_dtype)              # (h, h)
    w2 = params["w2"].astype(compute_dtype)              # (h, h)
    w3 = params["w3"].T.astype(compute_dtype)            # (h, len_y)
    b0 = params["b0"].reshape(hidden, 1).astype(elementwise_dtype)
    b1 = params["b1"].reshape(hidden, 1).astype(elementwise_dtype)
    b2 = params["b2"].reshape(hidden, 1).astype(elementwise_dtype)
    b3 = params["b3"].reshape(len_y, 1).astype(jnp.float32)

    flops = 2 * b_pad * (len_x * hidden + 2 * hidden * hidden + hidden * len_y)
    bytes_accessed = int(
        x_p.size * x_p.dtype.itemsize + b_pad * len_y * 4
        + sum(a.size * a.dtype.itemsize for a in (w0, w1, w2, w3, b0, b1, b2, b3)))

    kernel = _make_mlp_kernel(compute_dtype, elementwise_dtype, len_y)

    def build(single_buffer_consts):
        const_kw = ({"pipeline_mode": pl.Buffered(1)}
                    if (single_buffer_consts and hasattr(pl, "Buffered")) else {})
        const = lambda shape: pl.BlockSpec(shape, lambda i: (0, 0), **const_kw)
        return pl.pallas_call(
            kernel,
            out_shape=jax.ShapeDtypeStruct((len_y, b_pad), jnp.float32),
            grid_spec=pltpu.PrefetchScalarGridSpec(
                num_scalar_prefetch=0,
                grid=(num_tiles,),
                in_specs=[
                    pl.BlockSpec((batch_tile, len_x), lambda i: (i, 0)),  # x tile
                    const((hidden, len_x)),    # w0
                    const((hidden, 1)),        # b0
                    const((hidden, hidden)),   # w1
                    const((hidden, 1)),        # b1
                    const((hidden, hidden)),   # w2
                    const((hidden, 1)),        # b2
                    const((hidden, len_y)),    # w3 (stored (in, out))
                    const((len_y, 1)),         # b3
                ],
                out_specs=pl.BlockSpec((len_y, batch_tile), lambda i: (0, i)),
            ),
            compiler_params=pltpu.CompilerParams(
                dimension_semantics=("parallel",),
                vmem_limit_bytes=32 * 1024 * 1024,   # safe on v7x's 64 MiB VMEM
            ),
            cost_estimate=pl.CostEstimate(
                flops=flops, transcendentals=0, bytes_accessed=bytes_accessed),
        )

    try:
        out_t = build(True)(x_p, w0, b0, w1, b1, w2, b2, w3, b3)
    except Exception:
        # Fallback for jax versions without BlockSpec pipeline_mode / Buffered(1).
        out_t = build(False)(x_p, w0, b0, w1, b1, w2, b2, w3, b3)

    return out_t[:, :B].T   # (B, len_y); padded batch columns dropped


def xavier_uniform(key, fan_out, fan_in):
    # Matches nn.init.xavier_uniform_ (gain=1) on a PyTorch (out, in) weight.
    bound = (6.0 / (fan_in + fan_out)) ** 0.5
    return jax.random.uniform(key, (fan_out, fan_in), jnp.float32, -bound, bound)


def init_params(key, len_x, len_y=1, hidden=128):
    k0, k1, k2, k3 = jax.random.split(key, 4)
    return {
        "w0": xavier_uniform(k0, hidden, len_x),
        "b0": jnp.full((hidden,), 0.01, jnp.float32),
        "w1": xavier_uniform(k1, hidden, hidden),
        "b1": jnp.full((hidden,), 0.01, jnp.float32),
        "w2": xavier_uniform(k2, hidden, hidden),
        "b2": jnp.full((hidden,), 0.01, jnp.float32),
        "w3": xavier_uniform(k3, len_y, hidden),
        "b3": jnp.full((len_y,), 0.01, jnp.float32),
    }


def reference_forward(x, p, compute_dtype=jnp.float32, elementwise_dtype=jnp.float32):
    """Pure-JAX reference mirroring the kernel's dtype handling: weights/inputs
    rounded to compute_dtype, f32 matmul accumulation, bias+ReLU in
    elementwise_dtype, final layer accumulated and emitted in f32."""
    mm = functools.partial(jnp.matmul, precision=lax.Precision.HIGHEST)
    cd = lambda a: a.astype(compute_dtype).astype(jnp.float32)
    ew = lambda a: a.astype(elementwise_dtype)
    z = x
    for i in range(3):
        z = mm(cd(z), cd(p[f"w{i}"]).T)
        z = jnp.maximum(ew(z) + ew(p[f"b{i}"]), 0).astype(jnp.float32)
    return mm(cd(z), cd(p["w3"]).T) + p["b3"]


if __name__ == "__main__":
    key = jax.random.PRNGKey(0)
    k_x1, k_x2, k_x3, k_p, k_p3 = jax.random.split(key, 5)

    LEN_X = 16   # dataset.shape[1] - 1 features; scalar target by default
    params = init_params(k_p, LEN_X, len_y=1)

    # 1) Small-batch f32 check (pads 8 -> 128 rows, single grid step).
    x_small = jax.random.normal(k_x1, (8, LEN_X), jnp.float32)
    out_f32 = jax.block_until_ready(
        performance_estimator_forward(x_small, params, compute_dtype=jnp.float32))
    ref_f32 = reference_forward(x_small, params, jnp.float32, jnp.float32)
    assert out_f32.shape == (8, 1)
    assert jnp.allclose(out_f32, ref_f32, atol=1e-3, rtol=1e-3), "f32 mismatch"

    # 2) Multi-tile bf16 check (300 rows -> tile 256, 2 "parallel" grid steps).
    ew_dt = _default_elementwise_dtype(jnp.bfloat16)
    x_big = jax.random.normal(k_x2, (300, LEN_X), jnp.float32)
    out_bf16 = jax.block_until_ready(
        performance_estimator_forward(x_big, params, compute_dtype=jnp.bfloat16))
    ref_bf16 = reference_forward(x_big, params, jnp.bfloat16, ew_dt)
    assert out_bf16.shape == (300, 1)
    assert jnp.allclose(out_bf16, ref_bf16, atol=3e-2, rtol=3e-2), "bf16 mismatch"

    # 3) len_y > 1 exercises the general MXU final-layer branch (f32).
    params3 = init_params(k_p3, LEN_X, len_y=3)
    x3 = jax.random.normal(k_x3, (64, LEN_X), jnp.float32)
    out3 = jax.block_until_ready(
        performance_estimator_forward(x3, params3, compute_dtype=jnp.float32))
    ref3 = reference_forward(x3, params3, jnp.float32, jnp.float32)
    assert out3.shape == (64, 3)
    assert jnp.allclose(out3, ref3, atol=1e-3, rtol=1e-3), "len_y=3 mismatch"

    print("KERNEL_OK")
</pallas_src>

<mosaic_0001>
module attributes {stable_mosaic.version = 11 : i64} {
  func.func @mlp_kernel(%arg0: i32, %arg1: memref<128x16xf32, #tpu.memory_space<vmem>>, %arg2: memref<128x16xf32, #tpu.memory_space<vmem>>, %arg3: memref<128x1xf32, #tpu.memory_space<vmem>>, %arg4: memref<128x128xf32, #tpu.memory_space<vmem>>, %arg5: memref<128x1xf32, #tpu.memory_space<vmem>>, %arg6: memref<128x128xf32, #tpu.memory_space<vmem>>, %arg7: memref<128x1xf32, #tpu.memory_space<vmem>>, %arg8: memref<128x1xf32, #tpu.memory_space<vmem>>, %arg9: memref<1x1xf32, #tpu.memory_space<vmem>>, %arg10: memref<1x128xf32, #tpu.memory_space<vmem>>) attributes {dimension_semantics = [#tpu.dimension_semantics<parallel>], iteration_bounds = array<i64: 1>, scalar_prefetch = 0 : i64, scratch_operands = 0 : i64, tpu.core_type = #tpu.core_type<tc>, window_params = [{transform_indices = @transform_0, window_bounds = array<i64: 128, 16>}, {pipeline_mode = #tpu.pipeline_mode<synchronous>, transform_indices = @transform_1, window_bounds = array<i64: 128, 16>}, {pipeline_mode = #tpu.pipeline_mode<synchronous>, transform_indices = @transform_2, window_bounds = array<i64: 128, 1>}, {pipeline_mode = #tpu.pipeline_mode<synchronous>, transform_indices = @transform_3, window_bounds = array<i64: 128, 128>}, {pipeline_mode = #tpu.pipeline_mode<synchronous>, transform_indices = @transform_4, window_bounds = array<i64: 128, 1>}, {pipeline_mode = #tpu.pipeline_mode<synchronous>, transform_indices = @transform_5, window_bounds = array<i64: 128, 128>}, {pipeline_mode = #tpu.pipeline_mode<synchronous>, transform_indices = @transform_6, window_bounds = array<i64: 128, 1>}, {pipeline_mode = #tpu.pipeline_mode<synchronous>, transform_indices = @transform_7, window_bounds = array<i64: 128, 1>}, {pipeline_mode = #tpu.pipeline_mode<synchronous>, transform_indices = @transform_8, window_bounds = array<i64: 1, 1>}, {transform_indices = @transform_9, window_bounds = array<i64: 1, 128>}]} {
    %c0 = arith.constant 0 : index
    %c0_0 = arith.constant 0 : index
    %0 = vector.load %arg1[%c0, %c0_0] : memref<128x16xf32, #tpu.memory_space<vmem>>, vector<128x16xf32>
    %c0_1 = arith.constant 0 : index
    %c0_2 = arith.constant 0 : index
    %1 = vector.load %arg2[%c0_1, %c0_2] : memref<128x16xf32, #tpu.memory_space<vmem>>, vector<128x16xf32>
    %cst = arith.constant dense<0.000000e+00> : vector<128x128xf32>
    %2 = tpu.matmul %1, %0, %cst {dimension_numbers = #tpu.dot_dimension_numbers<[1], [1], [0], [0], [0, 0, 1, 0], [], []>} : vector<128x16xf32>, vector<128x16xf32>, vector<128x128xf32> -> vector<128x128xf32>
    %c0_3 = arith.constant 0 : index
    %c0_4 = arith.constant 0 : index
    %3 = vector.load %arg3[%c0_3, %c0_4] : memref<128x1xf32, #tpu.memory_space<vmem>>, vector<128x1xf32>
    %4 = vector.broadcast %3 : vector<128x1xf32> to vector<128x128xf32>
    %5 = arith.addf %2, %4 : vector<128x128xf32>
    %cst_5 = arith.constant 0.000000e+00 : f32
    %6 = vector.broadcast %cst_5 : f32 to vector<128x128xf32>
    %7 = arith.maximumf %5, %6 : vector<128x128xf32>
    %c0_6 = arith.constant 0 : index
    %c0_7 = arith.constant 0 : index
    %8 = vector.load %arg4[%c0_6, %c0_7] : memref<128x128xf32, #tpu.memory_space<vmem>>, vector<128x128xf32>
    %cst_8 = arith.constant dense<0.000000e+00> : vector<128x128xf32>
    %9 = tpu.matmul %8, %7, %cst_8 {dimension_numbers = #tpu.dot_dimension_numbers<[1], [0], [0], [1], [0, 0, 1, 1], [], []>} : vector<128x128xf32>, vector<128x128xf32>, vector<128x128xf32> -> vector<128x128xf32>
    %c0_9 = arith.constant 0 : index
    %c0_10 = arith.constant 0 : index
    %10 = vector.load %arg5[%c0_9, %c0_10] : memref<128x1xf32, #tpu.memory_space<vmem>>, vector<128x1xf32>
    %11 = vector.broadcast %10 : vector<128x1xf32> to vector<128x128xf32>
    %12 = arith.addf %9, %11 : vector<128x128xf32>
    %cst_11 = arith.constant 0.000000e+00 : f32
    %13 = vector.broadcast %cst_11 : f32 to vector<128x128xf32>
    %14 = arith.maximumf %12, %13 : vector<128x128xf32>
    %c0_12 = arith.constant 0 : index
    %c0_13 = arith.constant 0 : index
    %15 = vector.load %arg6[%c0_12, %c0_13] : memref<128x128xf32, #tpu.memory_space<vmem>>, vector<128x128xf32>
    %cst_14 = arith.constant dense<0.000000e+00> : vector<128x128xf32>
    %16 = tpu.matmul %15, %14, %cst_14 {dimension_numbers = #tpu.dot_dimension_numbers<[1], [0], [0], [1], [0, 0, 1, 1], [], []>} : vector<128x128xf32>, vector<128x128xf32>, vector<128x128xf32> -> vector<128x128xf32>
    %c0_15 = arith.constant 0 : index
    %c0_16 = arith.constant 0 : index
    %17 = vector.load %arg7[%c0_15, %c0_16] : memref<128x1xf32, #tpu.memory_space<vmem>>, vector<128x1xf32>
    %18 = vector.broadcast %17 : vector<128x1xf32> to vector<128x128xf32>
    %19 = arith.addf %16, %18 : vector<128x128xf32>
    %cst_17 = arith.constant 0.000000e+00 : f32
    %20 = vector.broadcast %cst_17 : f32 to vector<128x128xf32>
    %21 = arith.maximumf %19, %20 : vector<128x128xf32>
    %c0_18 = arith.constant 0 : index
    %c0_19 = arith.constant 0 : index
    %22 = vector.load %arg8[%c0_18, %c0_19] : memref<128x1xf32, #tpu.memory_space<vmem>>, vector<128x1xf32>
    %23 = vector.broadcast %22 : vector<128x1xf32> to vector<128x128xf32>
    %24 = arith.mulf %21, %23 : vector<128x128xf32>
    %cst_20 = arith.constant dense<0.000000e+00> : vector<128xf32>
    %25 = vector.multi_reduction <add>, %24, %cst_20 [0] : vector<128x128xf32> to vector<128xf32>
    %26 = vector.shape_cast %25 : vector<128xf32> to vector<1x128xf32>
    %c0_21 = arith.constant 0 : index
    %c0_22 = arith.constant 0 : index
    %27 = vector.load %arg9[%c0_21, %c0_22] : memref<1x1xf32, #tpu.memory_space<vmem>>, vector<1x1xf32>
    %28 = vector.broadcast %27 : vector<1x1xf32> to vector<1x128xf32>
    %29 = arith.addf %26, %28 : vector<1x128xf32>
    %c0_23 = arith.constant 0 : index
    %c0_24 = arith.constant 0 : index
    %30 = vector.load %arg10[%c0_23, %c0_24] : memref<1x128xf32, #tpu.memory_space<vmem>>, vector<1x128xf32>
    tpu.vector_store %arg10[%c0_23, %c0_24], %29 {strides = array<i32>} : memref<1x128xf32, #tpu.memory_space<vmem>>, vector<1x128xf32>,
    return
  }
  func.func @transform_0(%arg0: i32) -> (i32, i32) {
    %c0_i32 = arith.constant 0 : i32
    %c0_i32_0 = arith.constant 0 : i32
    return %arg0, %c0_i32 : i32, i32
  }
  func.func @transform_1(%arg0: i32) -> (i32, i32) {
    %c0_i32 = arith.constant 0 : i32
    %c0_i32_0 = arith.constant 0 : i32
    %c0_i32_1 = arith.constant 0 : i32
    return %c0_i32, %c0_i32_0 : i32, i32
  }
  func.func @transform_2(%arg0: i32) -> (i32, i32) {
    %c0_i32 = arith.constant 0 : i32
    %c0_i32_0 = arith.constant 0 : i32
    %c0_i32_1 = arith.constant 0 : i32
    return %c0_i32, %c0_i32_0 : i32, i32
  }
  func.func @transform_3(%arg0: i32) -> (i32, i32) {
    %c0_i32 = arith.constant 0 : i32
    %c0_i32_0 = arith.constant 0 : i32
    %c0_i32_1 = arith.constant 0 : i32
    return %c0_i32, %c0_i32_0 : i32, i32
  }
  func.func @transform_4(%arg0: i32) -> (i32, i32) {
    %c0_i32 = arith.constant 0 : i32
    %c0_i32_0 = arith.constant 0 : i32
    %c0_i32_1 = arith.constant 0 : i32
    return %c0_i32, %c0_i32_0 : i32, i32
  }
  func.func @transform_5(%arg0: i32) -> (i32, i32) {
    %c0_i32 = arith.constant 0 : i32
    %c0_i32_0 = arith.constant 0 : i32
    %c0_i32_1 = arith.constant 0 : i32
    return %c0_i32, %c0_i32_0 : i32, i32
  }
  func.func @transform_6(%arg0: i32) -> (i32, i32) {
    %c0_i32 = arith.constant 0 : i32
    %c0_i32_0 = arith.constant 0 : i32
    %c0_i32_1 = arith.constant 0 : i32
    return %c0_i32, %c0_i32_0 : i32, i32
  }
  func.func @transform_7(%arg0: i32) -> (i32, i32) {
    %c0_i32 = arith.constant 0 : i32
    %c0_i32_0 = arith.constant 0 : i32
    %c0_i32_1 = arith.constant 0 : i32
    return %c0_i32, %c0_i32_0 : i32, i32
  }
  func.func @transform_8(%arg0: i32) -> (i32, i32) {
    %c0_i32 = arith.constant 0 : i32
    %c0_i32_0 = arith.constant 0 : i32
    %c0_i32_1 = arith.constant 0 : i32
    return %c0_i32, %c0_i32_0 : i32, i32
  }
  func.func @transform_9(%arg0: i32) -> (i32, i32) {
    %c0_i32 = arith.constant 0 : i32
    %c0_i32_0 = arith.constant 0 : i32
    return %c0_i32, %arg0 : i32, i32
  }
}

module attributes {stable_mosaic.version = 11 : i64} {
  func.func @mlp_kernel(%arg0: i32, %arg1: memref<128x16xf32, #tpu.memory_space<vmem>>, %arg2: memref<128x16xf32, #tpu.memory_space<vmem>>, %arg3: memref<128x1xf32, #tpu.memory_space<vmem>>, %arg4: memref<128x128xf32, #tpu.memory_space<vmem>>, %arg5: memref<128x1xf32, #tpu.memory_space<vmem>>, %arg6: memref<128x128xf32, #tpu.memory_space<vmem>>, %arg7: memref<128x1xf32, #tpu.memory_space<vmem>>, %arg8: memref<128x1xf32, #tpu.memory_space<vmem>>, %arg9: memref<1x1xf32, #tpu.memory_space<vmem>>, %arg10: memref<1x128xf32, #tpu.memory_space<vmem>>) attributes {dimension_semantics = [#tpu.dimension_semantics<parallel>], iteration_bounds = array<i64: 1>, scalar_prefetch = 0 : i64, scratch_operands = 0 : i64, tpu.core_type = #tpu.core_type<tc>, window_params = [{transform_indices = @transform_0, window_bounds = array<i64: 128, 16>}, {pipeline_mode = #tpu.pipeline_mode<synchronous>, transform_indices = @transform_1, window_bounds = array<i64: 128, 16>}, {pipeline_mode = #tpu.pipeline_mode<synchronous>, transform_indices = @transform_2, window_bounds = array<i64: 128, 1>}, {pipeline_mode = #tpu.pipeline_mode<synchronous>, transform_indices = @transform_3, window_bounds = array<i64: 128, 128>}, {pipeline_mode = #tpu.pipeline_mode<synchronous>, transform_indices = @transform_4, window_bounds = array<i64: 128, 1>}, {pipeline_mode = #tpu.pipeline_mode<synchronous>, transform_indices = @transform_5, window_bounds = array<i64: 128, 128>}, {pipeline_mode = #tpu.pipeline_mode<synchronous>, transform_indices = @transform_6, window_bounds = array<i64: 128, 1>}, {pipeline_mode = #tpu.pipeline_mode<synchronous>, transform_indices = @transform_7, window_bounds = array<i64: 128, 1>}, {pipeline_mode = #tpu.pipeline_mode<synchronous>, transform_indices = @transform_8, window_bounds = array<i64: 1, 1>}, {transform_indices = @transform_9, window_bounds = array<i64: 1, 128>}]} {
    %c0 = arith.constant 0 : index
    %c0_0 = arith.constant 0 : index
    %0 = vector.load %arg1[%c0, %c0_0] : memref<128x16xf32, #tpu.memory_space<vmem>>, vector<128x16xf32>
    %c0_1 = arith.constant 0 : index
    %c0_2 = arith.constant 0 : index
    %1 = vector.load %arg2[%c0_1, %c0_2] : memref<128x16xf32, #tpu.memory_space<vmem>>, vector<128x16xf32>
    %cst = arith.constant dense<0.000000e+00> : vector<128x128xf32>
    %2 = tpu.matmul %1, %0, %cst {dimension_numbers = #tpu.dot_dimension_numbers<[1], [1], [0], [0], [0, 0, 1, 0], [], []>} : vector<128x16xf32>, vector<128x16xf32>, vector<128x128xf32> -> vector<128x128xf32>
    %c0_3 = arith.constant 0 : index
    %c0_4 = arith.constant 0 : index
    %3 = vector.load %arg3[%c0_3, %c0_4] : memref<128x1xf32, #tpu.memory_space<vmem>>, vector<128x1xf32>
    %4 = vector.broadcast %3 : vector<128x1xf32> to vector<128x128xf32>
    %5 = arith.addf %2, %4 : vector<128x128xf32>
    %cst_5 = arith.constant 0.000000e+00 : f32
    %6 = vector.broadcast %cst_5 : f32 to vector<128x128xf32>
    %7 = arith.maximumf %5, %6 : vector<128x128xf32>
    %c0_6 = arith.constant 0 : index
    %c0_7 = arith.constant 0 : index
    %8 = vector.load %arg4[%c0_6, %c0_7] : memref<128x128xf32, #tpu.memory_space<vmem>>, vector<128x128xf32>
    %cst_8 = arith.constant dense<0.000000e+00> : vector<128x128xf32>
    %9 = tpu.matmul %8, %7, %cst_8 {dimension_numbers = #tpu.dot_dimension_numbers<[1], [0], [0], [1], [0, 0, 1, 1], [], []>} : vector<128x128xf32>, vector<128x128xf32>, vector<128x128xf32> -> vector<128x128xf32>
    %c0_9 = arith.constant 0 : index
    %c0_10 = arith.constant 0 : index
    %10 = vector.load %arg5[%c0_9, %c0_10] : memref<128x1xf32, #tpu.memory_space<vmem>>, vector<128x1xf32>
    %11 = vector.broadcast %10 : vector<128x1xf32> to vector<128x128xf32>
    %12 = arith.addf %9, %11 : vector<128x128xf32>
    %cst_11 = arith.constant 0.000000e+00 : f32
    %13 = vector.broadcast %cst_11 : f32 to vector<128x128xf32>
    %14 = arith.maximumf %12, %13 : vector<128x128xf32>
    %c0_12 = arith.constant 0 : index
    %c0_13 = arith.constant 0 : index
    %15 = vector.load %arg6[%c0_12, %c0_13] : memref<128x128xf32, #tpu.memory_space<vmem>>, vector<128x128xf32>
    %cst_14 = arith.constant dense<0.000000e+00> : vector<128x128xf32>
    %16 = tpu.matmul %15, %14, %cst_14 {dimension_numbers = #tpu.dot_dimension_numbers<[1], [0], [0], [1], [0, 0, 1, 1], [], []>} : vector<128x128xf32>, vector<128x128xf32>, vector<128x128xf32> -> vector<128x128xf32>
    %c0_15 = arith.constant 0 : index
    %c0_16 = arith.constant 0 : index
    %17 = vector.load %arg7[%c0_15, %c0_16] : memref<128x1xf32, #tpu.memory_space<vmem>>, vector<128x1xf32>
    %18 = vector.broadcast %17 : vector<128x1xf32> to vector<128x128xf32>
    %19 = arith.addf %16, %18 : vector<128x128xf32>
    %cst_17 = arith.constant 0.000000e+00 : f32
    %20 = vector.broadcast %cst_17 : f32 to vector<128x128xf32>
    %21 = arith.maximumf %19, %20 : vector<128x128xf32>
    %c0_18 = arith.constant 0 : index
    %c0_19 = arith.constant 0 : index
    %22 = vector.load %arg8[%c0_18, %c0_19] : memref<128x1xf32, #tpu.memory_space<vmem>>, vector<128x1xf32>
    %23 = vector.broadcast %22 : vector<128x1xf32> to vector<128x128xf32>
    %24 = arith.mulf %21, %23 : vector<128x128xf32>
    %cst_20 = arith.constant dense<0.000000e+00> : vector<128xf32>
    %25 = vector.multi_reduction <add>, %24, %cst_20 [0] : vector<128x128xf32> to vector<128xf32>
    %26 = vector.shape_cast %25 : vector<128xf32> to vector<1x128xf32>
    %c0_21 = arith.constant 0 : index
    %c0_22 = arith.constant 0 : index
    %27 = vector.load %arg9[%c0_21, %c0_22] : memref<1x1xf32, #tpu.memory_space<vmem>>, vector<1x1xf32>
    %28 = vector.broadcast %27 : vector<1x1xf32> to vector<1x128xf32>
    %29 = arith.addf %26, %28 : vector<1x128xf32>
    %c0_23 = arith.constant 0 : index
    %c0_24 = arith.constant 0 : index
    %30 = vector.load %arg10[%c0_23, %c0_24] : memref<1x128xf32, #tpu.memory_space<vmem>>, vector<1x128xf32>
    tpu.vector_store %arg10[%c0_23, %c0_24], %29 {strides = array<i32>} : memref<1x128xf32, #tpu.memory_space<vmem>>, vector<1x128xf32>,
    return
  }
  func.func @transform_0(%arg0: i32) -> (i32, i32) {
    %c0_i32 = arith.constant 0 : i32
    %c0_i32_0 = arith.constant 0 : i32
    return %arg0, %c0_i32 : i32, i32
  }
  func.func @transform_1(%arg0: i32) -> (i32, i32) {
    %c0_i32 = arith.constant 0 : i32
    %c0_i32_0 = arith.constant 0 : i32
    %c0_i32_1 = arith.constant 0 : i32
    return %c0_i32, %c0_i32_0 : i32, i32
  }
  func.func @transform_2(%arg0: i32) -> (i32, i32) {
    %c0_i32 = arith.constant 0 : i32
    %c0_i32_0 = arith.constant 0 : i32
    %c0_i32_1 = arith.constant 0 : i32
    return %c0_i32, %c0_i32_0 : i32, i32
  }
  func.func @transform_3(%arg0: i32) -> (i32, i32) {
    %c0_i32 = arith.constant 0 : i32
    %c0_i32_0 = arith.constant 0 : i32
    %c0_i32_1 = arith.constant 0 : i32
    return %c0_i32, %c0_i32_0 : i32, i32
  }
  func.func @transform_4(%arg0: i32) -> (i32, i32) {
    %c0_i32 = arith.constant 0 : i32
    %c0_i32_0 = arith.constant 0 : i32
    %c0_i32_1 = arith.constant 0 : i32
    return %c0_i32, %c0_i32_0 : i32, i32
  }
  func.func @transform_5(%arg0: i32) -> (i32, i32) {
    %c0_i32 = arith.constant 0 : i32
    %c0_i32_0 = arith.constant 0 : i32
    %c0_i32_1 = arith.constant 0 : i32
    return %c0_i32, %c0_i32_0 : i32, i32
  }
  func.func @transform_6(%arg0: i32) -> (i32, i32) {
    %c0_i32 = arith.constant 0 : i32
    %c0_i32_0 = arith.constant 0 : i32
    %c0_i32_1 = arith.constant 0 : i32
    return %c0_i32, %c0_i32_0 : i32, i32
  }
  func.func @transform_7(%arg0: i32) -> (i32, i32) {
    %c0_i32 = arith.constant 0 : i32
    %c0_i32_0 = arith.constant 0 : i32
    %c0_i32_1 = arith.constant 0 : i32
    return %c0_i32, %c0_i32_0 : i32, i32
  }
  func.func @transform_8(%arg0: i32) -> (i32, i32) {
    %c0_i32 = arith.constant 0 : i32
    %c0_i32_0 = arith.constant 0 : i32
    %c0_i32_1 = arith.constant 0 : i32
    return %c0_i32, %c0_i32_0 : i32, i32
  }
  func.func @transform_9(%arg0: i32) -> (i32, i32) {
    %c0_i32 = arith.constant 0 : i32
    %c0_i32_0 = arith.constant 0 : i32
    return %c0_i32, %arg0 : i32, i32
  }
}

</mosaic_0001>

<llo_original>
// kernel: tpu_custom_call.1
$region0: #{tpu_custom_call.1}
  #allocation0 [shape = 'u32[]', space=smem, size = 0x4, offset = 0x4, fixed_abs, tag = 'smem constant byte address 0x4 - core index']
  #allocation1 [shape = 'u32[72,128]{1,0:T(1,128)}', space=vmem, size = 0x9000, scoped, tag = 'internal scratch']
  #allocation2 [shape = 'f32[1,1]{1,0:T(1,128)S(1)}', space=vmem, size = 0x200, scoped, tag = 'scoped memory for tpu_custom_call.1']
  %s0 = inlined_call_operand.vmem [shape: f32[128,16], index: 0, kind: input, shape index: {}]
  %s1 = inlined_call_operand.vmem [shape: f32[128,16], index: 1, kind: input, shape index: {}]
  %s2 = inlined_call_operand.vmem [shape: f32[128,1], index: 2, kind: input, shape index: {}]
  %s3 = inlined_call_operand.vmem [shape: f32[128,128], index: 3, kind: input, shape index: {}]
  %s4 = inlined_call_operand.vmem [shape: f32[128,1], index: 4, kind: input, shape index: {}]
  %s5 = inlined_call_operand.vmem [shape: f32[128,128], index: 5, kind: input, shape index: {}]
  %s6 = inlined_call_operand.vmem [shape: f32[128,1], index: 6, kind: input, shape index: {}]
  %s7 = inlined_call_operand.vmem [shape: f32[128,1], index: 7, kind: input, shape index: {}]
  %s8 = inlined_call_operand.<no memory space> [shape: f32[1,1], index: 8, kind: input, shape index: {}]
  %s9 = inlined_call_operand.hbm [shape: f32[1,128], index: 9, kind: output, shape index: {}]
  %s10 = sld [smem:[#allocation0]]
  $region46: #{tpu_custom_call.1} parent=0
    _
  %s12 = ssub.s32 1, %s10
  %s13 = scalar_select 0, %s12, %s10
  %v14 = vstv %s8
  %15 = vst [vmem:[#allocation2] sm:$0x1] %v14
  $region1: #{tpu_custom_call.1} parent=0
    #allocation3 [shape = 'u8[512]{0}', space=vmem, size = 0x400, scoped, tag = 'output window, operand 0, single buffered']
    #allocation4 [shape = 's32[1]{0}', space=sflag, size = 0x4, scoped, tag = 'scoped memory for tpu_custom_call.1']
    %16 = vsyncpa [#allocation4], 0
    // Predicated region
    $region2: #{tpu_custom_call.1} parent=1 // pred_check
      _
    $region3: #{tpu_custom_call.1} parent=1 // pred_check_branch
      %18 = sbr.rel (0) target = $region5
    $region4: #{tpu_custom_call.1} parent=1 // pred_region
      _
    $region5: #{tpu_custom_call.1} parent=1 // pred_fallthru
      _
    // Predicated region
    $region6: #{tpu_custom_call.1} parent=1 // pred_check
      _
    $region7: #{tpu_custom_call.1} parent=1 // pred_check_branch
      %20 = sbr.rel (0) target = $region9
    $region8: #{tpu_custom_call.1} parent=1 // pred_region
      _
    $region9: #{tpu_custom_call.1} parent=1 // pred_fallthru
      _
    // Predicated region
    $region10: #{tpu_custom_call.1} parent=1 // pred_check
      _
    $region11: #{tpu_custom_call.1} parent=1 // pred_check_branch
      %22 = sbr.rel (0) target = $region13
    $region12: #{tpu_custom_call.1} parent=1 // pred_region
      _
    $region13: #{tpu_custom_call.1} parent=1 // pred_fallthru
      _
    // Predicated region
    $region14: #{tpu_custom_call.1} parent=1 // pred_check
      _
    $region15: #{tpu_custom_call.1} parent=1 // pred_check_branch
      %24 = sbr.rel (0) target = $region17
    $region16: #{tpu_custom_call.1} parent=1 // pred_region
      _
    $region17: #{tpu_custom_call.1} parent=1 // pred_fallthru
      _
    // Predicated region
    $region18: #{tpu_custom_call.1} parent=1 // pred_check
      _
    $region19: #{tpu_custom_call.1} parent=1 // pred_check_branch
      %26 = sbr.rel (0) target = $region21
    $region20: #{tpu_custom_call.1} parent=1 // pred_region
      _
    $region21: #{tpu_custom_call.1} parent=1 // pred_fallthru
      _
    // Predicated region
    $region22: #{tpu_custom_call.1} parent=1 // pred_check
      _
    $region23: #{tpu_custom_call.1} parent=1 // pred_check_branch
      %28 = sbr.rel (0) target = $region25
    $region24: #{tpu_custom_call.1} parent=1 // pred_region
      _
    $region25: #{tpu_custom_call.1} parent=1 // pred_fallthru
      _
    // Predicated region
    $region26: #{tpu_custom_call.1} parent=1 // pred_check
      _
    $region27: #{tpu_custom_call.1} parent=1 // pred_check_branch
      %30 = sbr.rel (0) target = $region29
    $region28: #{tpu_custom_call.1} parent=1 // pred_region
      _
    $region29: #{tpu_custom_call.1} parent=1 // pred_fallthru
      _
    // Predicated region
    $region30: #{tpu_custom_call.1} parent=1 // pred_check
      _
    $region31: #{tpu_custom_call.1} parent=1 // pred_check_branch
      %32 = sbr.rel (0) target = $region33
    $region32: #{tpu_custom_call.1} parent=1 // pred_region
      _
    $region33: #{tpu_custom_call.1} parent=1 // pred_fallthru
      _
    // Predicated region
    $region34: #{tpu_custom_call.1} parent=1 // pred_check
      _
    $region35: #{tpu_custom_call.1} parent=1 // pred_check_branch
      %34 = sbr.rel (0) target = $region37
    $region36: #{tpu_custom_call.1} parent=1 // pred_region
      _
    $region37: #{tpu_custom_call.1} parent=1 // pred_fallthru
      _
    %v35 = vld [vmem:[%s0] sm:$0xff]
    %v36 = vld [vmem:[%s0 + $0x8] sm:$0xff]
    %v37 = vld [vmem:[%s0 + $0x10] sm:$0xff]
    %v38 = vld [vmem:[%s0 + $0x18] sm:$0xff]
    %v39 = vld [vmem:[%s0 + $0x20] sm:$0xff]
    %v40 = vld [vmem:[%s0 + $0x28] sm:$0xff]
    %v41 = vld [vmem:[%s0 + $0x30] sm:$0xff]
    %v42 = vld [vmem:[%s0 + $0x38] sm:$0xff]
    %v43 = vld [vmem:[%s0 + $0x40] sm:$0xff]
    %v44 = vld [vmem:[%s0 + $0x48] sm:$0xff]
    %v45 = vld [vmem:[%s0 + $0x50] sm:$0xff]
    %v46 = vld [vmem:[%s0 + $0x58] sm:$0xff]
    %v47 = vld [vmem:[%s0 + $0x60] sm:$0xff]
    %v48 = vld [vmem:[%s0 + $0x68] sm:$0xff]
    %v49 = vld [vmem:[%s0 + $0x70] sm:$0xff]
    %v50 = vld [vmem:[%s0 + $0x78] sm:$0xff]
    %v51 = vld [vmem:[%s1] sm:$0xff]
    %v52 = vld [vmem:[%s1 + $0x8] sm:$0xff]
    %v53 = vld [vmem:[%s1 + $0x10] sm:$0xff]
    %v54 = vld [vmem:[%s1 + $0x18] sm:$0xff]
    %v55 = vld [vmem:[%s1 + $0x20] sm:$0xff]
    %v56 = vld [vmem:[%s1 + $0x28] sm:$0xff]
    %v57 = vld [vmem:[%s1 + $0x30] sm:$0xff]
    %v58 = vld [vmem:[%s1 + $0x38] sm:$0xff]
    %v59 = vld [vmem:[%s1 + $0x40] sm:$0xff]
    %v60 = vld [vmem:[%s1 + $0x48] sm:$0xff]
    %v61 = vld [vmem:[%s1 + $0x50] sm:$0xff]
    %v62 = vld [vmem:[%s1 + $0x58] sm:$0xff]
    %v63 = vld [vmem:[%s1 + $0x60] sm:$0xff]
    %v64 = vld [vmem:[%s1 + $0x68] sm:$0xff]
    %v65 = vld [vmem:[%s1 + $0x70] sm:$0xff]
    %v66 = vld [vmem:[%s1 + $0x78] sm:$0xff]
    %v67 = vld [vmem:[%s2] sm:$0xff]
    %v68 = vld [vmem:[%s2 + $0x8] sm:$0xff]
    %v69 = vld [vmem:[%s2 + $0x10] sm:$0xff]
    %v70 = vld [vmem:[%s2 + $0x18] sm:$0xff]
    %v71 = vld [vmem:[%s2 + $0x20] sm:$0xff]
    %v72 = vld [vmem:[%s2 + $0x28] sm:$0xff]
    %v73 = vld [vmem:[%s2 + $0x30] sm:$0xff]
    %v74 = vld [vmem:[%s2 + $0x38] sm:$0xff]
    %v75 = vld [vmem:[%s2 + $0x40] sm:$0xff]
    %v76 = vld [vmem:[%s2 + $0x48] sm:$0xff]
    %v77 = vld [vmem:[%s2 + $0x50] sm:$0xff]
    %v78 = vld [vmem:[%s2 + $0x58] sm:$0xff]
    %v79 = vld [vmem:[%s2 + $0x60] sm:$0xff]
    %v80 = vld [vmem:[%s2 + $0x68] sm:$0xff]
    %v81 = vld [vmem:[%s2 + $0x70] sm:$0xff]
    %v82 = vld [vmem:[%s2 + $0x78] sm:$0xff]
    %84 = vset.pattern.permute.xlu0 0
    %85 = vperm.xlu0 %84, %v67
    %v86 = vpop.permute.xlu0 %85
    %89 = vset.pattern.permute.xlu0 0
    %90 = vperm.xlu0 %89, %v68
    %v91 = vpop.permute.xlu0 %90
    %94 = vset.pattern.permute.xlu0 0
    %95 = vperm.xlu0 %94, %v69
    %v96 = vpop.permute.xlu0 %95
    %99 = vset.pattern.permute.xlu0 0
    %100 = vperm.xlu0 %99, %v70
    %v101 = vpop.permute.xlu0 %100
    %104 = vset.pattern.permute.xlu0 0
    %105 = vperm.xlu0 %104, %v71
    %v106 = vpop.permute.xlu0 %105
    %109 = vset.pattern.permute.xlu0 0
    %110 = vperm.xlu0 %109, %v72
    %v111 = vpop.permute.xlu0 %110
    %114 = vset.pattern.permute.xlu0 0
    %115 = vperm.xlu0 %114, %v73
    %v116 = vpop.permute.xlu0 %115
    %119 = vset.pattern.permute.xlu0 0
    %120 = vperm.xlu0 %119, %v74
    %v121 = vpop.permute.xlu0 %120
    %124 = vset.pattern.permute.xlu0 0
    %125 = vperm.xlu0 %124, %v75
    %v126 = vpop.permute.xlu0 %125
    %129 = vset.pattern.permute.xlu0 0
    %130 = vperm.xlu0 %129, %v76
    %v131 = vpop.permute.xlu0 %130
    %134 = vset.pattern.permute.xlu0 0
    %135 = vperm.xlu0 %134, %v77
    %v136 = vpop.permute.xlu0 %135
    %139 = vset.pattern.permute.xlu0 0
    %140 = vperm.xlu0 %139, %v78
    %v141 = vpop.permute.xlu0 %140
    %144 = vset.pattern.permute.xlu0 0
    %145 = vperm.xlu0 %144, %v79
    %v146 = vpop.permute.xlu0 %145
    %149 = vset.pattern.permute.xlu0 0
    %150 = vperm.xlu0 %149, %v80
    %v151 = vpop.permute.xlu0 %150
    %154 = vset.pattern.permute.xlu0 0
    %155 = vperm.xlu0 %154, %v81
    %v156 = vpop.permute.xlu0 %155
    %159 = vset.pattern.permute.xlu0 0
    %160 = vperm.xlu0 %159, %v82
    %v161 = vpop.permute.xlu0 %160
    %vm163 = vcmask 130048
    %v165 = vsel %vm163, %v51, 0
    %v168 = vsel %vm163, %v52, 0
    %v171 = vsel %vm163, %v53, 0
    %v174 = vsel %vm163, %v54, 0
    %v177 = vsel %vm163, %v55, 0
    %v180 = vsel %vm163, %v56, 0
    %v183 = vsel %vm163, %v57, 0
    %v186 = vsel %vm163, %v58, 0
    %v189 = vsel %vm163, %v59, 0
    %v192 = vsel %vm163, %v60, 0
    %v195 = vsel %vm163, %v61, 0
    %v198 = vsel %vm163, %v62, 0
    %v201 = vsel %vm163, %v63, 0
    %v204 = vsel %vm163, %v64, 0
    %v207 = vsel %vm163, %v65, 0
    %v210 = vsel %vm163, %v66, 0
    %v213 = vsel %vm163, %v35, 0
    %v216 = vsel %vm163, %v36, 0
    %v219 = vsel %vm163, %v37, 0
    %v222 = vsel %vm163, %v38, 0
    %v225 = vsel %vm163, %v39, 0
    %v228 = vsel %vm163, %v40, 0
    %v231 = vsel %vm163, %v41, 0
    %v234 = vsel %vm163, %v42, 0
    %v237 = vsel %vm163, %v43, 0
    %v240 = vsel %vm163, %v44, 0
    %v243 = vsel %vm163, %v45, 0
    %v246 = vsel %vm163, %v46, 0
    %v249 = vsel %vm163, %v47, 0
    %v252 = vsel %vm163, %v48, 0
    %v255 = vsel %vm163, %v49, 0
    %v258 = vsel %vm163, %v50, 0
    %260 = vmatpush.xpose.msra.mxu0 %v258
    %261 = vmatpush.xpose.msra.mxu0 %v255
    %262 = vmatpush.xpose.msra.mxu0 %v252
    %263 = vmatpush.xpose.msra.mxu0 %v249
    %264 = vmatpush.xpose.msra.mxu0 %v246
    %265 = vmatpush.xpose.msra.mxu0 %v243
    %266 = vmatpush.xpose.msra.mxu0 %v240
    %267 = vmatpush.xpose.msra.mxu0 %v237
    %268 = vmatpush.xpose.msra.mxu0 %v234
    %269 = vmatpush.xpose.msra.mxu0 %v231
    %270 = vmatpush.xpose.msra.mxu0 %v228
    %271 = vmatpush.xpose.msra.mxu0 %v225
    %272 = vmatpush.xpose.msra.mxu0 %v222
    %273 = vmatpush.xpose.msra.mxu0 %v219
    %274 = vmatpush.xpose.msra.mxu0 %v216
    %275 = vmatpush.xpose.msra.mxu0 %v213
    %276 = vmatmul.f32.gmra.mxu0 %v165
    %v277 = vpop.f32.mrf.mxu0
    %v278 = vadd.f32 %v86, %v277
    %279 = vmatmul.f32.gmra.mxu0 %v168
    %v280 = vpop.f32.mrf.mxu0
    %v281 = vadd.f32 %v91, %v280
    %282 = vmatmul.f32.gmra.mxu0 %v171
    %v283 = vpop.f32.mrf.mxu0
    %v284 = vadd.f32 %v96, %v283
    %285 = vmatmul.f32.gmra.mxu0 %v174
    %v286 = vpop.f32.mrf.mxu0
    %v287 = vadd.f32 %v101, %v286
    %288 = vmatmul.f32.gmra.mxu0 %v177
    %v289 = vpop.f32.mrf.mxu0
    %v290 = vadd.f32 %v106, %v289
    %291 = vmatmul.f32.gmra.mxu0 %v180
    %v292 = vpop.f32.mrf.mxu0
    %v293 = vadd.f32 %v111, %v292
    %294 = vmatmul.f32.gmra.mxu0 %v183
    %v295 = vpop.f32.mrf.mxu0
    %v296 = vadd.f32 %v116, %v295
    %297 = vmatmul.f32.gmra.mxu0 %v186
    %v298 = vpop.f32.mrf.mxu0
    %v299 = vadd.f32 %v121, %v298
    %300 = vmatmul.f32.gmra.mxu0 %v189
    %v301 = vpop.f32.mrf.mxu0
    %v302 = vadd.f32 %v126, %v301
    %303 = vmatmul.f32.gmra.mxu0 %v192
    %v304 = vpop.f32.mrf.mxu0
    %v305 = vadd.f32 %v131, %v304
    %306 = vmatmul.f32.gmra.mxu0 %v195
    %v307 = vpop.f32.mrf.mxu0
    %v308 = vadd.f32 %v136, %v307
    %309 = vmatmul.f32.gmra.mxu0 %v198
    %v310 = vpop.f32.mrf.mxu0
    %v311 = vadd.f32 %v141, %v310
    %312 = vmatmul.f32.gmra.mxu0 %v201
    %v313 = vpop.f32.mrf.mxu0
    %v314 = vadd.f32 %v146, %v313
    %315 = vmatmul.f32.gmra.mxu0 %v204
    %v316 = vpop.f32.mrf.mxu0
    %v317 = vadd.f32 %v151, %v316
    %318 = vmatmul.f32.gmra.mxu0 %v207
    %v319 = vpop.f32.mrf.mxu0
    %v320 = vadd.f32 %v156, %v319
    %321 = vmatmul.f32.gmra.mxu0 %v210
    %v322 = vpop.f32.mrf.mxu0
    %v323 = vadd.f32 %v161, %v322
    %324 = vdwg.mxu0
    %v325 = vmax.f32 %v278, 0.0
    %v326 = vmax.f32 %v281, 0.0
    %v327 = vmax.f32 %v284, 0.0
    %v328 = vmax.f32 %v287, 0.0
    %v329 = vmax.f32 %v290, 0.0
    %v330 = vmax.f32 %v293, 0.0
    %v331 = vmax.f32 %v296, 0.0
    %v332 = vmax.f32 %v299, 0.0
    %v333 = vmax.f32 %v302, 0.0
    %v334 = vmax.f32 %v305, 0.0
    %v335 = vmax.f32 %v308, 0.0
    %v336 = vmax.f32 %v311, 0.0
    %v337 = vmax.f32 %v314, 0.0
    %v338 = vmax.f32 %v317, 0.0
    %v339 = vmax.f32 %v320, 0.0
    %v340 = vmax.f32 %v323, 0.0
    %v341 = vld [vmem:[%s3] sm:$0xff]
    %v342 = vld [vmem:[%s3 + $0x8] sm:$0xff]
    %v343 = vld [vmem:[%s3 + $0x10] sm:$0xff]
    %v344 = vld [vmem:[%s3 + $0x18] sm:$0xff]
    %v345 = vld [vmem:[%s3 + $0x20] sm:$0xff]
    %v346 = vld [vmem:[%s3 + $0x28] sm:$0xff]
    %v347 = vld [vmem:[%s3 + $0x30] sm:$0xff]
    %v348 = vld [vmem:[%s3 + $0x38] sm:$0xff]
    %v349 = vld [vmem:[%s3 + $0x40] sm:$0xff]
    %v350 = vld [vmem:[%s3 + $0x48] sm:$0xff]
    %v351 = vld [vmem:[%s3 + $0x50] sm:$0xff]
    %v352 = vld [vmem:[%s3 + $0x58] sm:$0xff]
    %v353 = vld [vmem:[%s3 + $0x60] sm:$0xff]
    %v354 = vld [vmem:[%s3 + $0x68] sm:$0xff]
    %v355 = vld [vmem:[%s3 + $0x70] sm:$0xff]
    %v356 = vld [vmem:[%s3 + $0x78] sm:$0xff]
    %v357 = vld [vmem:[%s4] sm:$0xff]
    %v358 = vld [vmem:[%s4 + $0x8] sm:$0xff]
    %v359 = vld [vmem:[%s4 + $0x10] sm:$0xff]
    %v360 = vld [vmem:[%s4 + $0x18] sm:$0xff]
    %v361 = vld [vmem:[%s4 + $0x20] sm:$0xff]
    %v362 = vld [vmem:[%s4 + $0x28] sm:$0xff]
    %v363 = vld [vmem:[%s4 + $0x30] sm:$0xff]
    %v364 = vld [vmem:[%s4 + $0x38] sm:$0xff]
    %v365 = vld [vmem:[%s4 + $0x40] sm:$0xff]
    %v366 = vld [vmem:[%s4 + $0x48] sm:$0xff]
    %v367 = vld [vmem:[%s4 + $0x50] sm:$0xff]
    %v368 = vld [vmem:[%s4 + $0x58] sm:$0xff]
    %v369 = vld [vmem:[%s4 + $0x60] sm:$0xff]
    %v370 = vld [vmem:[%s4 + $0x68] sm:$0xff]
    %v371 = vld [vmem:[%s4 + $0x70] sm:$0xff]
    %v372 = vld [vmem:[%s4 + $0x78] sm:$0xff]
    %374 = vset.pattern.permute.xlu0 0
    %375 = vperm.xlu0 %374, %v357
    %v376 = vpop.permute.xlu0 %375
    %379 = vset.pattern.permute.xlu0 0
    %380 = vperm.xlu0 %379, %v358
    %v381 = vpop.permute.xlu0 %380
    %384 = vset.pattern.permute.xlu0 0
    %385 = vperm.xlu0 %384, %v359
    %v386 = vpop.permute.xlu0 %385
    %389 = vset.pattern.permute.xlu0 0
    %390 = vperm.xlu0 %389, %v360
    %v391 = vpop.permute.xlu0 %390
    %394 = vset.pattern.permute.xlu0 0
    %395 = vperm.xlu0 %394, %v361
    %v396 = vpop.permute.xlu0 %395
    %399 = vset.pattern.permute.xlu0 0
    %400 = vperm.xlu0 %399, %v362
    %v401 = vpop.permute.xlu0 %400
    %404 = vset.pattern.permute.xlu0 0
    %405 = vperm.xlu0 %404, %v363
    %v406 = vpop.permute.xlu0 %405
    %409 = vset.pattern.permute.xlu0 0
    %410 = vperm.xlu0 %409, %v364
    %v411 = vpop.permute.xlu0 %410
    %414 = vset.pattern.permute.xlu0 0
    %415 = vperm.xlu0 %414, %v365
    %v416 = vpop.permute.xlu0 %415
    %419 = vset.pattern.permute.xlu0 0
    %420 = vperm.xlu0 %419, %v366
    %v421 = vpop.permute.xlu0 %420
    %424 = vset.pattern.permute.xlu0 0
    %425 = vperm.xlu0 %424, %v367
    %v426 = vpop.permute.xlu0 %425
    %429 = vset.pattern.permute.xlu0 0
    %430 = vperm.xlu0 %429, %v368
    %v431 = vpop.permute.xlu0 %430
    %434 = vset.pattern.permute.xlu0 0
    %435 = vperm.xlu0 %434, %v369
    %v436 = vpop.permute.xlu0 %435
    %439 = vset.pattern.permute.xlu0 0
    %440 = vperm.xlu0 %439, %v370
    %v441 = vpop.permute.xlu0 %440
    %444 = vset.pattern.permute.xlu0 0
    %445 = vperm.xlu0 %444, %v371
    %v446 = vpop.permute.xlu0 %445
    %449 = vset.pattern.permute.xlu0 0
    %450 = vperm.xlu0 %449, %v372
    %v451 = vpop.permute.xlu0 %450
    %453 = vmatpush.msra.mxu0 %v340
    %454 = vmatpush.msra.mxu0 %v339
    %455 = vmatpush.msra.mxu0 %v338
    %456 = vmatpush.msra.mxu0 %v337
    %457 = vmatpush.msra.mxu0 %v336
    %458 = vmatpush.msra.mxu0 %v335
    %459 = vmatpush.msra.mxu0 %v334
    %460 = vmatpush.msra.mxu0 %v333
    %461 = vmatpush.msra.mxu0 %v332
    %462 = vmatpush.msra.mxu0 %v331
    %463 = vmatpush.msra.mxu0 %v330
    %464 = vmatpush.msra.mxu0 %v329
    %465 = vmatpush.msra.mxu0 %v328
    %466 = vmatpush.msra.mxu0 %v327
    %467 = vmatpush.msra.mxu0 %v326
    %468 = vmatpush.msra.mxu0 %v325
    %469 = vmatmul.f32.gmra.mxu0 %v341
    %v470 = vpop.f32.mrf.mxu0
    %v471 = vadd.f32 %v376, %v470
    %472 = vmatmul.f32.gmra.mxu0 %v342
    %v473 = vpop.f32.mrf.mxu0
    %v474 = vadd.f32 %v381, %v473
    %475 = vmatmul.f32.gmra.mxu0 %v343
    %v476 = vpop.f32.mrf.mxu0
    %v477 = vadd.f32 %v386, %v476
    %478 = vmatmul.f32.gmra.mxu0 %v344
    %v479 = vpop.f32.mrf.mxu0
    %v480 = vadd.f32 %v391, %v479
    %481 = vmatmul.f32.gmra.mxu0 %v345
    %v482 = vpop.f32.mrf.mxu0
    %v483 = vadd.f32 %v396, %v482
    %484 = vmatmul.f32.gmra.mxu0 %v346
    %v485 = vpop.f32.mrf.mxu0
    %v486 = vadd.f32 %v401, %v485
    %487 = vmatmul.f32.gmra.mxu0 %v347
    %v488 = vpop.f32.mrf.mxu0
    %v489 = vadd.f32 %v406, %v488
    %490 = vmatmul.f32.gmra.mxu0 %v348
    %v491 = vpop.f32.mrf.mxu0
    %v492 = vadd.f32 %v411, %v491
    %493 = vmatmul.f32.gmra.mxu0 %v349
    %v494 = vpop.f32.mrf.mxu0
    %v495 = vadd.f32 %v416, %v494
    %496 = vmatmul.f32.gmra.mxu0 %v350
    %v497 = vpop.f32.mrf.mxu0
    %v498 = vadd.f32 %v421, %v497
    %499 = vmatmul.f32.gmra.mxu0 %v351
    %v500 = vpop.f32.mrf.mxu0
    %v501 = vadd.f32 %v426, %v500
    %502 = vmatmul.f32.gmra.mxu0 %v352
    %v503 = vpop.f32.mrf.mxu0
    %v504 = vadd.f32 %v431, %v503
    %505 = vmatmul.f32.gmra.mxu0 %v353
    %v506 = vpop.f32.mrf.mxu0
    %v507 = vadd.f32 %v436, %v506
    %508 = vmatmul.f32.gmra.mxu0 %v354
    %v509 = vpop.f32.mrf.mxu0
    %v510 = vadd.f32 %v441, %v509
    %511 = vmatmul.f32.gmra.mxu0 %v355
    %v512 = vpop.f32.mrf.mxu0
    %v513 = vadd.f32 %v446, %v512
    %514 = vmatmul.f32.gmra.mxu0 %v356
    %v515 = vpop.f32.mrf.mxu0
    %v516 = vadd.f32 %v451, %v515
    %517 = vdwg.mxu0
    %v518 = vmax.f32 %v471, 0.0
    %v519 = vmax.f32 %v474, 0.0
    %v520 = vmax.f32 %v477, 0.0
    %v521 = vmax.f32 %v480, 0.0
    %v522 = vmax.f32 %v483, 0.0
    %v523 = vmax.f32 %v486, 0.0
    %v524 = vmax.f32 %v489, 0.0
    %v525 = vmax.f32 %v492, 0.0
    %v526 = vmax.f32 %v495, 0.0
    %v527 = vmax.f32 %v498, 0.0
    %v528 = vmax.f32 %v501, 0.0
    %v529 = vmax.f32 %v504, 0.0
    %v530 = vmax.f32 %v507, 0.0
    %v531 = vmax.f32 %v510, 0.0
    %v532 = vmax.f32 %v513, 0.0
    %v533 = vmax.f32 %v516, 0.0
    %v534 = vld [vmem:[%s5] sm:$0xff]
    %v535 = vld [vmem:[%s5 + $0x8] sm:$0xff]
    %v536 = vld [vmem:[%s5 + $0x10] sm:$0xff]
    %v537 = vld [vmem:[%s5 + $0x18] sm:$0xff]
    %v538 = vld [vmem:[%s5 + $0x20] sm:$0xff]
    %v539 = vld [vmem:[%s5 + $0x28] sm:$0xff]
    %v540 = vld [vmem:[%s5 + $0x30] sm:$0xff]
    %v541 = vld [vmem:[%s5 + $0x38] sm:$0xff]
    %v542 = vld [vmem:[%s5 + $0x40] sm:$0xff]
    %v543 = vld [vmem:[%s5 + $0x48] sm:$0xff]
    %v544 = vld [vmem:[%s5 + $0x50] sm:$0xff]
    %v545 = vld [vmem:[%s5 + $0x58] sm:$0xff]
    %v546 = vld [vmem:[%s5 + $0x60] sm:$0xff]
    %v547 = vld [vmem:[%s5 + $0x68] sm:$0xff]
    %v548 = vld [vmem:[%s5 + $0x70] sm:$0xff]
    %v549 = vld [vmem:[%s5 + $0x78] sm:$0xff]
    %v550 = vld [vmem:[%s6] sm:$0xff]
    %v551 = vld [vmem:[%s6 + $0x8] sm:$0xff]
    %v552 = vld [vmem:[%s6 + $0x10] sm:$0xff]
    %v553 = vld [vmem:[%s6 + $0x18] sm:$0xff]
    %v554 = vld [vmem:[%s6 + $0x20] sm:$0xff]
    %v555 = vld [vmem:[%s6 + $0x28] sm:$0xff]
    %v556 = vld [vmem:[%s6 + $0x30] sm:$0xff]
    %v557 = vld [vmem:[%s6 + $0x38] sm:$0xff]
    %v558 = vld [vmem:[%s6 + $0x40] sm:$0xff]
    %v559 = vld [vmem:[%s6 + $0x48] sm:$0xff]
    %v560 = vld [vmem:[%s6 + $0x50] sm:$0xff]
    %v561 = vld [vmem:[%s6 + $0x58] sm:$0xff]
    %v562 = vld [vmem:[%s6 + $0x60] sm:$0xff]
    %v563 = vld [vmem:[%s6 + $0x68] sm:$0xff]
    %v564 = vld [vmem:[%s6 + $0x70] sm:$0xff]
    %v565 = vld [vmem:[%s6 + $0x78] sm:$0xff]
    %567 = vset.pattern.permute.xlu0 0
    %568 = vperm.xlu0 %567, %v550
    %v569 = vpop.permute.xlu0 %568
    %572 = vset.pattern.permute.xlu0 0
    %573 = vperm.xlu0 %572, %v551
    %v574 = vpop.permute.xlu0 %573
    %577 = vset.pattern.permute.xlu0 0
    %578 = vperm.xlu0 %577, %v552
    %v579 = vpop.permute.xlu0 %578
    %582 = vset.pattern.permute.xlu0 0
    %583 = vperm.xlu0 %582, %v553
    %v584 = vpop.permute.xlu0 %583
    %587 = vset.pattern.permute.xlu0 0
    %588 = vperm.xlu0 %587, %v554
    %v589 = vpop.permute.xlu0 %588
    %592 = vset.pattern.permute.xlu0 0
    %593 = vperm.xlu0 %592, %v555
    %v594 = vpop.permute.xlu0 %593
    %597 = vset.pattern.permute.xlu0 0
    %598 = vperm.xlu0 %597, %v556
    %v599 = vpop.permute.xlu0 %598
    %602 = vset.pattern.permute.xlu0 0
    %603 = vperm.xlu0 %602, %v557
    %v604 = vpop.permute.xlu0 %603
    %607 = vset.pattern.permute.xlu0 0
    %608 = vperm.xlu0 %607, %v558
    %v609 = vpop.permute.xlu0 %608
    %612 = vset.pattern.permute.xlu0 0
    %613 = vperm.xlu0 %612, %v559
    %v614 = vpop.permute.xlu0 %613
    %617 = vset.pattern.permute.xlu0 0
    %618 = vperm.xlu0 %617, %v560
    %v619 = vpop.permute.xlu0 %618
    %622 = vset.pattern.permute.xlu0 0
    %623 = vperm.xlu0 %622, %v561
    %v624 = vpop.permute.xlu0 %623
    %627 = vset.pattern.permute.xlu0 0
    %628 = vperm.xlu0 %627, %v562
    %v629 = vpop.permute.xlu0 %628
    %632 = vset.pattern.permute.xlu0 0
    %633 = vperm.xlu0 %632, %v563
    %v634 = vpop.permute.xlu0 %633
    %637 = vset.pattern.permute.xlu0 0
    %638 = vperm.xlu0 %637, %v564
    %v639 = vpop.permute.xlu0 %638
    %642 = vset.pattern.permute.xlu0 0
    %643 = vperm.xlu0 %642, %v565
    %v644 = vpop.permute.xlu0 %643
    %646 = vmatpush.msra.mxu0 %v533
    %647 = vmatpush.msra.mxu0 %v532
    %648 = vmatpush.msra.mxu0 %v531
    %649 = vmatpush.msra.mxu0 %v530
    %650 = vmatpush.msra.mxu0 %v529
    %651 = vmatpush.msra.mxu0 %v528
    %652 = vmatpush.msra.mxu0 %v527
    %653 = vmatpush.msra.mxu0 %v526
    %654 = vmatpush.msra.mxu0 %v525
    %655 = vmatpush.msra.mxu0 %v524
    %656 = vmatpush.msra.mxu0 %v523
    %657 = vmatpush.msra.mxu0 %v522
    %658 = vmatpush.msra.mxu0 %v521
    %659 = vmatpush.msra.mxu0 %v520
    %660 = vmatpush.msra.mxu0 %v519
    %661 = vmatpush.msra.mxu0 %v518
    %662 = vmatmul.f32.gmra.mxu0 %v534
    %v663 = vpop.f32.mrf.mxu0
    %v664 = vadd.f32 %v569, %v663
    %665 = vmatmul.f32.gmra.mxu0 %v535
    %v666 = vpop.f32.mrf.mxu0
    %v667 = vadd.f32 %v574, %v666
    %668 = vmatmul.f32.gmra.mxu0 %v536
    %v669 = vpop.f32.mrf.mxu0
    %v670 = vadd.f32 %v579, %v669
    %671 = vmatmul.f32.gmra.mxu0 %v537
    %v672 = vpop.f32.mrf.mxu0
    %v673 = vadd.f32 %v584, %v672
    %674 = vmatmul.f32.gmra.mxu0 %v538
    %v675 = vpop.f32.mrf.mxu0
    %v676 = vadd.f32 %v589, %v675
    %677 = vmatmul.f32.gmra.mxu0 %v539
    %v678 = vpop.f32.mrf.mxu0
    %v679 = vadd.f32 %v594, %v678
    %680 = vmatmul.f32.gmra.mxu0 %v540
    %v681 = vpop.f32.mrf.mxu0
    %v682 = vadd.f32 %v599, %v681
    %683 = vmatmul.f32.gmra.mxu0 %v541
    %v684 = vpop.f32.mrf.mxu0
    %v685 = vadd.f32 %v604, %v684
    %686 = vmatmul.f32.gmra.mxu0 %v542
    %v687 = vpop.f32.mrf.mxu0
    %v688 = vadd.f32 %v609, %v687
    %689 = vmatmul.f32.gmra.mxu0 %v543
    %v690 = vpop.f32.mrf.mxu0
    %v691 = vadd.f32 %v614, %v690
    %692 = vmatmul.f32.gmra.mxu0 %v544
    %v693 = vpop.f32.mrf.mxu0
    %v694 = vadd.f32 %v619, %v693
    %695 = vmatmul.f32.gmra.mxu0 %v545
    %v696 = vpop.f32.mrf.mxu0
    %v697 = vadd.f32 %v624, %v696
    %698 = vmatmul.f32.gmra.mxu0 %v546
    %v699 = vpop.f32.mrf.mxu0
    %v700 = vadd.f32 %v629, %v699
    %701 = vmatmul.f32.gmra.mxu0 %v547
    %v702 = vpop.f32.mrf.mxu0
    %v703 = vadd.f32 %v634, %v702
    %704 = vmatmul.f32.gmra.mxu0 %v548
    %v705 = vpop.f32.mrf.mxu0
    %v706 = vadd.f32 %v639, %v705
    %707 = vmatmul.f32.gmra.mxu0 %v549
    %v708 = vpop.f32.mrf.mxu0
    %v709 = vadd.f32 %v644, %v708
    %710 = vdwg.mxu0
    %v711 = vmax.f32 %v664, 0.0
    %v712 = vmax.f32 %v667, 0.0
    %v713 = vmax.f32 %v670, 0.0
    %v714 = vmax.f32 %v673, 0.0
    %v715 = vmax.f32 %v676, 0.0
    %v716 = vmax.f32 %v679, 0.0
    %v717 = vmax.f32 %v682, 0.0
    %v718 = vmax.f32 %v685, 0.0
    %v719 = vmax.f32 %v688, 0.0
    %v720 = vmax.f32 %v691, 0.0
    %v721 = vmax.f32 %v694, 0.0
    %v722 = vmax.f32 %v697, 0.0
    %v723 = vmax.f32 %v700, 0.0
    %v724 = vmax.f32 %v703, 0.0
    %v725 = vmax.f32 %v706, 0.0
    %v726 = vmax.f32 %v709, 0.0
    %v727 = vld [vmem:[%s7] sm:$0xff]
    %v728 = vld [vmem:[%s7 + $0x8] sm:$0xff]
    %v729 = vld [vmem:[%s7 + $0x10] sm:$0xff]
    %v730 = vld [vmem:[%s7 + $0x18] sm:$0xff]
    %v731 = vld [vmem:[%s7 + $0x20] sm:$0xff]
    %v732 = vld [vmem:[%s7 + $0x28] sm:$0xff]
    %v733 = vld [vmem:[%s7 + $0x30] sm:$0xff]
    %v734 = vld [vmem:[%s7 + $0x38] sm:$0xff]
    %v735 = vld [vmem:[%s7 + $0x40] sm:$0xff]
    %v736 = vld [vmem:[%s7 + $0x48] sm:$0xff]
    %v737 = vld [vmem:[%s7 + $0x50] sm:$0xff]
    %v738 = vld [vmem:[%s7 + $0x58] sm:$0xff]
    %v739 = vld [vmem:[%s7 + $0x60] sm:$0xff]
    %v740 = vld [vmem:[%s7 + $0x68] sm:$0xff]
    %v741 = vld [vmem:[%s7 + $0x70] sm:$0xff]
    %v742 = vld [vmem:[%s7 + $0x78] sm:$0xff]
    %744 = vset.pattern.permute.xlu0 0
    %745 = vperm.xlu0 %744, %v727
    %v746 = vpop.permute.xlu0 %745
    %749 = vset.pattern.permute.xlu0 0
    %750 = vperm.xlu0 %749, %v728
    %v751 = vpop.permute.xlu0 %750
    %754 = vset.pattern.permute.xlu0 0
    %755 = vperm.xlu0 %754, %v729
    %v756 = vpop.permute.xlu0 %755
    %759 = vset.pattern.permute.xlu0 0
    %760 = vperm.xlu0 %759, %v730
    %v761 = vpop.permute.xlu0 %760
    %764 = vset.pattern.permute.xlu0 0
    %765 = vperm.xlu0 %764, %v731
    %v766 = vpop.permute.xlu0 %765
    %769 = vset.pattern.permute.xlu0 0
    %770 = vperm.xlu0 %769, %v732
    %v771 = vpop.permute.xlu0 %770
    %774 = vset.pattern.permute.xlu0 0
    %775 = vperm.xlu0 %774, %v733
    %v776 = vpop.permute.xlu0 %775
    %779 = vset.pattern.permute.xlu0 0
    %780 = vperm.xlu0 %779, %v734
    %v781 = vpop.permute.xlu0 %780
    %784 = vset.pattern.permute.xlu0 0
    %785 = vperm.xlu0 %784, %v735
    %v786 = vpop.permute.xlu0 %785
    %789 = vset.pattern.permute.xlu0 0
    %790 = vperm.xlu0 %789, %v736
    %v791 = vpop.permute.xlu0 %790
    %794 = vset.pattern.permute.xlu0 0
    %795 = vperm.xlu0 %794, %v737
    %v796 = vpop.permute.xlu0 %795
    %799 = vset.pattern.permute.xlu0 0
    %800 = vperm.xlu0 %799, %v738
    %v801 = vpop.permute.xlu0 %800
    %804 = vset.pattern.permute.xlu0 0
    %805 = vperm.xlu0 %804, %v739
    %v806 = vpop.permute.xlu0 %805
    %809 = vset.pattern.permute.xlu0 0
    %810 = vperm.xlu0 %809, %v740
    %v811 = vpop.permute.xlu0 %810
    %814 = vset.pattern.permute.xlu0 0
    %815 = vperm.xlu0 %814, %v741
    %v816 = vpop.permute.xlu0 %815
    %819 = vset.pattern.permute.xlu0 0
    %820 = vperm.xlu0 %819, %v742
    %v821 = vpop.permute.xlu0 %820
    %v823 = vmul.f32 %v711, %v746
    %v824 = vmul.f32 %v712, %v751
    %v825 = vmul.f32 %v713, %v756
    %v826 = vmul.f32 %v714, %v761
    %v827 = vmul.f32 %v715, %v766
    %v828 = vmul.f32 %v716, %v771
    %v829 = vmul.f32 %v717, %v776
    %v830 = vmul.f32 %v718, %v781
    %v831 = vmul.f32 %v719, %v786
    %v832 = vmul.f32 %v720, %v791
    %v833 = vmul.f32 %v721, %v796
    %v834 = vmul.f32 %v722, %v801
    %v835 = vmul.f32 %v723, %v806
    %v836 = vmul.f32 %v724, %v811
    %v837 = vmul.f32 %v725, %v816
    %v838 = vmul.f32 %v726, %v821
    %v839 = vadd.f32 %v823, %v824
    %v840 = vadd.f32 %v839, %v825
    %v841 = vadd.f32 %v840, %v826
    %v842 = vadd.f32 %v841, %v827
    %v843 = vadd.f32 %v842, %v828
    %v844 = vadd.f32 %v843, %v829
    %v845 = vadd.f32 %v844, %v830
    %v846 = vadd.f32 %v845, %v831
    %v847 = vadd.f32 %v846, %v832
    %v848 = vadd.f32 %v847, %v833
    %v849 = vadd.f32 %v848, %v834
    %v850 = vadd.f32 %v849, %v835
    %v851 = vadd.f32 %v850, %v836
    %v852 = vadd.f32 %v851, %v837
    %v853 = vadd.f32 %v852, %v838
    %v854 = vrot.slane %v853, 4
    %v855 = vadd.f32 %v853, %v854
    %v856 = vrot.slane %v855, 2
    %v857 = vadd.f32 %v855, %v856
    %v858 = vrot.slane %v857, 1
    %v859 = vadd.f32 %v857, %v858
    %v860 = vld [vmem:[#allocation2] sm:$0x1]
    %862 = vset.pattern.permute.xlu0 0
    %863 = vperm.xlu0 %862, %v860
    %v864 = vpop.permute.xlu0 %863
    %v866 = vperm.slane %v864, 0
    %v867 = vadd.f32 %v859, %v866
    %868 = vst [vmem:[#allocation3] sm:$0x1] %v867
    // Predicated region
    $region38: #{tpu_custom_call.1} parent=1 // pred_check
      _
    $region39: #{tpu_custom_call.1} parent=1 // pred_check_branch
      %870 = sbr.rel (0) target = $region41
    $region40: #{tpu_custom_call.1} parent=1 // pred_region
      %872 = vsyncadd [#allocation4], 0
      %s874 = sshll.u32 [#allocation3], 4
      %s875 = int_to_ptr.vmem [resolvable:$true] %s874
      %s876 = sshll.u32 %s9, 4
      %s877 = int_to_ptr.hbm [resolvable:$true] %s876
      %879 = dma.vmem_to_hbm [thread:$0]  %s875, 16, %s877, [#allocation4]
    $region41: #{tpu_custom_call.1} parent=1 // pred_fallthru
      _
    // Predicated region
    $region42: #{tpu_custom_call.1} parent=1 // pred_check
      _
    $region43: #{tpu_custom_call.1} parent=1 // pred_check_branch
      %881 = sbr.rel (0) target = $region45
    $region44: #{tpu_custom_call.1} parent=1 // pred_region
      %883 = dma.done [#allocation4], 16
    $region45: #{tpu_custom_call.1} parent=1 // pred_fallthru
      _
    %884 = vsyncpa [#allocation4], 1

// kernel: tpu_custom_call.1
$region0: #{tpu_custom_call.1}
  #allocation0 [shape = 'u32[]', space=smem, size = 0x4, offset = 0x4, fixed_abs, tag = 'smem constant byte address 0x4 - core index']
  #allocation1 [shape = 'u32[72,128]{1,0:T(1,128)}', space=vmem, size = 0x9000, scoped, tag = 'internal scratch']
  #allocation2 [shape = 'f32[1,1]{1,0:T(1,128)S(1)}', space=vmem, size = 0x200, scoped, tag = 'scoped memory for tpu_custom_call.1']
  %s0 = inlined_call_operand.vmem [shape: f32[128,16], index: 0, kind: input, shape index: {}]
  %s1 = inlined_call_operand.vmem [shape: f32[128,16], index: 1, kind: input, shape index: {}]
  %s2 = inlined_call_operand.vmem [shape: f32[128,1], index: 2, kind: input, shape index: {}]
  %s3 = inlined_call_operand.vmem [shape: f32[128,128], index: 3, kind: input, shape index: {}]
  %s4 = inlined_call_operand.vmem [shape: f32[128,1], index: 4, kind: input, shape index: {}]
  %s5 = inlined_call_operand.vmem [shape: f32[128,128], index: 5, kind: input, shape index: {}]
  %s6 = inlined_call_operand.vmem [shape: f32[128,1], index: 6, kind: input, shape index: {}]
  %s7 = inlined_call_operand.vmem [shape: f32[128,1], index: 7, kind: input, shape index: {}]
  %s8 = inlined_call_operand.<no memory space> [shape: f32[1,1], index: 8, kind: input, shape index: {}]
  %s9 = inlined_call_operand.hbm [shape: f32[1,128], index: 9, kind: output, shape index: {}]
  %s10 = sld [smem:[#allocation0]]
  $region46: #{tpu_custom_call.1} parent=0
    _
  %s12 = ssub.s32 1, %s10
  %s13 = scalar_select 0, %s12, %s10
  %v14 = vstv %s8
  %15 = vst [vmem:[#allocation2] sm:$0x1] %v14
  $region1: #{tpu_custom_call.1} parent=0
    #allocation3 [shape = 'u8[512]{0}', space=vmem, size = 0x400, scoped, tag = 'output window, operand 0, single buffered']
    #allocation4 [shape = 's32[1]{0}', space=sflag, size = 0x4, scoped, tag = 'scoped memory for tpu_custom_call.1']
    %16 = vsyncpa [#allocation4], 0
    // Predicated region
    $region2: #{tpu_custom_call.1} parent=1 // pred_check
      _
    $region3: #{tpu_custom_call.1} parent=1 // pred_check_branch
      %18 = sbr.rel (0) target = $region5
    $region4: #{tpu_custom_call.1} parent=1 // pred_region
      _
    $region5: #{tpu_custom_call.1} parent=1 // pred_fallthru
      _
    // Predicated region
    $region6: #{tpu_custom_call.1} parent=1 // pred_check
      _
    $region7: #{tpu_custom_call.1} parent=1 // pred_check_branch
      %20 = sbr.rel (0) target = $region9
    $region8: #{tpu_custom_call.1} parent=1 // pred_region
      _
    $region9: #{tpu_custom_call.1} parent=1 // pred_fallthru
      _
    // Predicated region
    $region10: #{tpu_custom_call.1} parent=1 // pred_check
      _
    $region11: #{tpu_custom_call.1} parent=1 // pred_check_branch
      %22 = sbr.rel (0) target = $region13
    $region12: #{tpu_custom_call.1} parent=1 // pred_region
      _
    $region13: #{tpu_custom_call.1} parent=1 // pred_fallthru
      _
    // Predicated region
    $region14: #{tpu_custom_call.1} parent=1 // pred_check
      _
    $region15: #{tpu_custom_call.1} parent=1 // pred_check_branch
      %24 = sbr.rel (0) target = $region17
    $region16: #{tpu_custom_call.1} parent=1 // pred_region
      _
    $region17: #{tpu_custom_call.1} parent=1 // pred_fallthru
      _
    // Predicated region
    $region18: #{tpu_custom_call.1} parent=1 // pred_check
      _
    $region19: #{tpu_custom_call.1} parent=1 // pred_check_branch
      %26 = sbr.rel (0) target = $region21
    $region20: #{tpu_custom_call.1} parent=1 // pred_region
      _
    $region21: #{tpu_custom_call.1} parent=1 // pred_fallthru
      _
    // Predicated region
    $region22: #{tpu_custom_call.1} parent=1 // pred_check
      _
    $region23: #{tpu_custom_call.1} parent=1 // pred_check_branch
      %28 = sbr.rel (0) target = $region25
    $region24: #{tpu_custom_call.1} parent=1 // pred_region
      _
    $region25: #{tpu_custom_call.1} parent=1 // pred_fallthru
      _
    // Predicated region
    $region26: #{tpu_custom_call.1} parent=1 // pred_check
      _
    $region27: #{tpu_custom_call.1} parent=1 // pred_check_branch
      %30 = sbr.rel (0) target = $region29
    $region28: #{tpu_custom_call.1} parent=1 // pred_region
      _
    $region29: #{tpu_custom_call.1} parent=1 // pred_fallthru
      _
    // Predicated region
    $region30: #{tpu_custom_call.1} parent=1 // pred_check
      _
    $region31: #{tpu_custom_call.1} parent=1 // pred_check_branch
      %32 = sbr.rel (0) target = $region33
    $region32: #{tpu_custom_call.1} parent=1 // pred_region
      _
    $region33: #{tpu_custom_call.1} parent=1 // pred_fallthru
      _
    // Predicated region
    $region34: #{tpu_custom_call.1} parent=1 // pred_check
      _
    $region35: #{tpu_custom_call.1} parent=1 // pred_check_branch
      %34 = sbr.rel (0) target = $region37
    $region36: #{tpu_custom_call.1} parent=1 // pred_region
      _
    $region37: #{tpu_custom_call.1} parent=1 // pred_fallthru
      _
    %v35 = vld [vmem:[%s0] sm:$0xff]
    %v36 = vld [vmem:[%s0 + $0x8] sm:$0xff]
    %v37 = vld [vmem:[%s0 + $0x10] sm:$0xff]
    %v38 = vld [vmem:[%s0 + $0x18] sm:$0xff]
    %v39 = vld [vmem:[%s0 + $0x20] sm:$0xff]
    %v40 = vld [vmem:[%s0 + $0x28] sm:$0xff]
    %v41 = vld [vmem:[%s0 + $0x30] sm:$0xff]
    %v42 = vld [vmem:[%s0 + $0x38] sm:$0xff]
    %v43 = vld [vmem:[%s0 + $0x40] sm:$0xff]
    %v44 = vld [vmem:[%s0 + $0x48] sm:$0xff]
    %v45 = vld [vmem:[%s0 + $0x50] sm:$0xff]
    %v46 = vld [vmem:[%s0 + $0x58] sm:$0xff]
    %v47 = vld [vmem:[%s0 + $0x60] sm:$0xff]
    %v48 = vld [vmem:[%s0 + $0x68] sm:$0xff]
    %v49 = vld [vmem:[%s0 + $0x70] sm:$0xff]
    %v50 = vld [vmem:[%s0 + $0x78] sm:$0xff]
    %v51 = vld [vmem:[%s1] sm:$0xff]
    %v52 = vld [vmem:[%s1 + $0x8] sm:$0xff]
    %v53 = vld [vmem:[%s1 + $0x10] sm:$0xff]
    %v54 = vld [vmem:[%s1 + $0x18] sm:$0xff]
    %v55 = vld [vmem:[%s1 + $0x20] sm:$0xff]
    %v56 = vld [vmem:[%s1 + $0x28] sm:$0xff]
    %v57 = vld [vmem:[%s1 + $0x30] sm:$0xff]
    %v58 = vld [vmem:[%s1 + $0x38] sm:$0xff]
    %v59 = vld [vmem:[%s1 + $0x40] sm:$0xff]
    %v60 = vld [vmem:[%s1 + $0x48] sm:$0xff]
    %v61 = vld [vmem:[%s1 + $0x50] sm:$0xff]
    %v62 = vld [vmem:[%s1 + $0x58] sm:$0xff]
    %v63 = vld [vmem:[%s1 + $0x60] sm:$0xff]
    %v64 = vld [vmem:[%s1 + $0x68] sm:$0xff]
    %v65 = vld [vmem:[%s1 + $0x70] sm:$0xff]
    %v66 = vld [vmem:[%s1 + $0x78] sm:$0xff]
    %v67 = vld [vmem:[%s2] sm:$0xff]
    %v68 = vld [vmem:[%s2 + $0x8] sm:$0xff]
    %v69 = vld [vmem:[%s2 + $0x10] sm:$0xff]
    %v70 = vld [vmem:[%s2 + $0x18] sm:$0xff]
    %v71 = vld [vmem:[%s2 + $0x20] sm:$0xff]
    %v72 = vld [vmem:[%s2 + $0x28] sm:$0xff]
    %v73 = vld [vmem:[%s2 + $0x30] sm:$0xff]
    %v74 = vld [vmem:[%s2 + $0x38] sm:$0xff]
    %v75 = vld [vmem:[%s2 + $0x40] sm:$0xff]
    %v76 = vld [vmem:[%s2 + $0x48] sm:$0xff]
    %v77 = vld [vmem:[%s2 + $0x50] sm:$0xff]
    %v78 = vld [vmem:[%s2 + $0x58] sm:$0xff]
    %v79 = vld [vmem:[%s2 + $0x60] sm:$0xff]
    %v80 = vld [vmem:[%s2 + $0x68] sm:$0xff]
    %v81 = vld [vmem:[%s2 + $0x70] sm:$0xff]
    %v82 = vld [vmem:[%s2 + $0x78] sm:$0xff]
    %84 = vset.pattern.permute.xlu0 0
    %85 = vperm.xlu0 %84, %v67
    %v86 = vpop.permute.xlu0 %85
    %89 = vset.pattern.permute.xlu0 0
    %90 = vperm.xlu0 %89, %v68
    %v91 = vpop.permute.xlu0 %90
    %94 = vset.pattern.permute.xlu0 0
    %95 = vperm.xlu0 %94, %v69
    %v96 = vpop.permute.xlu0 %95
    %99 = vset.pattern.permute.xlu0 0
    %100 = vperm.xlu0 %99, %v70
    %v101 = vpop.permute.xlu0 %100
    %104 = vset.pattern.permute.xlu0 0
    %105 = vperm.xlu0 %104, %v71
    %v106 = vpop.permute.xlu0 %105
    %109 = vset.pattern.permute.xlu0 0
    %110 = vperm.xlu0 %109, %v72
    %v111 = vpop.permute.xlu0 %110
    %114 = vset.pattern.permute.xlu0 0
    %115 = vperm.xlu0 %114, %v73
    %v116 = vpop.permute.xlu0 %115
    %119 = vset.pattern.permute.xlu0 0
    %120 = vperm.xlu0 %119, %v74
    %v121 = vpop.permute.xlu0 %120
    %124 = vset.pattern.permute.xlu0 0
    %125 = vperm.xlu0 %124, %v75
    %v126 = vpop.permute.xlu0 %125
    %129 = vset.pattern.permute.xlu0 0
    %130 = vperm.xlu0 %129, %v76
    %v131 = vpop.permute.xlu0 %130
    %134 = vset.pattern.permute.xlu0 0
    %135 = vperm.xlu0 %134, %v77
    %v136 = vpop.permute.xlu0 %135
    %139 = vset.pattern.permute.xlu0 0
    %140 = vperm.xlu0 %139, %v78
    %v141 = vpop.permute.xlu0 %140
    %144 = vset.pattern.permute.xlu0 0
    %145 = vperm.xlu0 %144, %v79
    %v146 = vpop.permute.xlu0 %145
    %149 = vset.pattern.permute.xlu0 0
    %150 = vperm.xlu0 %149, %v80
    %v151 = vpop.permute.xlu0 %150
    %154 = vset.pattern.permute.xlu0 0
    %155 = vperm.xlu0 %154, %v81
    %v156 = vpop.permute.xlu0 %155
    %159 = vset.pattern.permute.xlu0 0
    %160 = vperm.xlu0 %159, %v82
    %v161 = vpop.permute.xlu0 %160
    %vm163 = vcmask 130048
    %v165 = vsel %vm163, %v51, 0
    %v168 = vsel %vm163, %v52, 0
    %v171 = vsel %vm163, %v53, 0
    %v174 = vsel %vm163, %v54, 0
    %v177 = vsel %vm163, %v55, 0
    %v180 = vsel %vm163, %v56, 0
    %v183 = vsel %vm163, %v57, 0
    %v186 = vsel %vm163, %v58, 0
    %v189 = vsel %vm163, %v59, 0
    %v192 = vsel %vm163, %v60, 0
    %v195 = vsel %vm163, %v61, 0
    %v198 = vsel %vm163, %v62, 0
    %v201 = vsel %vm163, %v63, 0
    %v204 = vsel %vm163, %v64, 0
    %v207 = vsel %vm163, %v65, 0
    %v210 = vsel %vm163, %v66, 0
    %v213 = vsel %vm163, %v35, 0
    %v216 = vsel %vm163, %v36, 0
    %v219 = vsel %vm163, %v37, 0
    %v222 = vsel %vm163, %v38, 0
    %v225 = vsel %vm163, %v39, 0
    %v228 = vsel %vm163, %v40, 0
    %v231 = vsel %vm163, %v41, 0
    %v234 = vsel %vm163, %v42, 0
    %v237 = vsel %vm163, %v43, 0
    %v240 = vsel %vm163, %v44, 0
    %v243 = vsel %vm163, %v45, 0
    %v246 = vsel %vm163, %v46, 0
    %v249 = vsel %vm163, %v47, 0
    %v252 = vsel %vm163, %v48, 0
    %v255 = vsel %vm163, %v49, 0
    %v258 = vsel %vm163, %v50, 0
    %260 = vmatpush.xpose.msra.mxu0 %v258
    %261 = vmatpush.xpose.msra.mxu0 %v255
    %262 = vmatpush.xpose.msra.mxu0 %v252
    %263 = vmatpush.xpose.msra.mxu0 %v249
    %264 = vmatpush.xpose.msra.mxu0 %v246
    %265 = vmatpush.xpose.msra.mxu0 %v243
    %266 = vmatpush.xpose.msra.mxu0 %v240
    %267 = vmatpush.xpose.msra.mxu0 %v237
    %268 = vmatpush.xpose.msra.mxu0 %v234
    %269 = vmatpush.xpose.msra.mxu0 %v231
    %270 = vmatpush.xpose.msra.mxu0 %v228
    %271 = vmatpush.xpose.msra.mxu0 %v225
    %272 = vmatpush.xpose.msra.mxu0 %v222
    %273 = vmatpush.xpose.msra.mxu0 %v219
    %274 = vmatpush.xpose.msra.mxu0 %v216
    %275 = vmatpush.xpose.msra.mxu0 %v213
    %276 = vmatmul.f32.gmra.mxu0 %v165
    %v277 = vpop.f32.mrf.mxu0
    %v278 = vadd.f32 %v86, %v277
    %279 = vmatmul.f32.gmra.mxu0 %v168
    %v280 = vpop.f32.mrf.mxu0
    %v281 = vadd.f32 %v91, %v280
    %282 = vmatmul.f32.gmra.mxu0 %v171
    %v283 = vpop.f32.mrf.mxu0
    %v284 = vadd.f32 %v96, %v283
    %285 = vmatmul.f32.gmra.mxu0 %v174
    %v286 = vpop.f32.mrf.mxu0
    %v287 = vadd.f32 %v101, %v286
    %288 = vmatmul.f32.gmra.mxu0 %v177
    %v289 = vpop.f32.mrf.mxu0
    %v290 = vadd.f32 %v106, %v289
    %291 = vmatmul.f32.gmra.mxu0 %v180
    %v292 = vpop.f32.mrf.mxu0
    %v293 = vadd.f32 %v111, %v292
    %294 = vmatmul.f32.gmra.mxu0 %v183
    %v295 = vpop.f32.mrf.mxu0
    %v296 = vadd.f32 %v116, %v295
    %297 = vmatmul.f32.gmra.mxu0 %v186
    %v298 = vpop.f32.mrf.mxu0
    %v299 = vadd.f32 %v121, %v298
    %300 = vmatmul.f32.gmra.mxu0 %v189
    %v301 = vpop.f32.mrf.mxu0
    %v302 = vadd.f32 %v126, %v301
    %303 = vmatmul.f32.gmra.mxu0 %v192
    %v304 = vpop.f32.mrf.mxu0
    %v305 = vadd.f32 %v131, %v304
    %306 = vmatmul.f32.gmra.mxu0 %v195
    %v307 = vpop.f32.mrf.mxu0
    %v308 = vadd.f32 %v136, %v307
    %309 = vmatmul.f32.gmra.mxu0 %v198
    %v310 = vpop.f32.mrf.mxu0
    %v311 = vadd.f32 %v141, %v310
    %312 = vmatmul.f32.gmra.mxu0 %v201
    %v313 = vpop.f32.mrf.mxu0
    %v314 = vadd.f32 %v146, %v313
    %315 = vmatmul.f32.gmra.mxu0 %v204
    %v316 = vpop.f32.mrf.mxu0
    %v317 = vadd.f32 %v151, %v316
    %318 = vmatmul.f32.gmra.mxu0 %v207
    %v319 = vpop.f32.mrf.mxu0
    %v320 = vadd.f32 %v156, %v319
    %321 = vmatmul.f32.gmra.mxu0 %v210
    %v322 = vpop.f32.mrf.mxu0
    %v323 = vadd.f32 %v161, %v322
    %324 = vdwg.mxu0
    %v325 = vmax.f32 %v278, 0.0
    %v326 = vmax.f32 %v281, 0.0
    %v327 = vmax.f32 %v284, 0.0
    %v328 = vmax.f32 %v287, 0.0
    %v329 = vmax.f32 %v290, 0.0
    %v330 = vmax.f32 %v293, 0.0
    %v331 = vmax.f32 %v296, 0.0
    %v332 = vmax.f32 %v299, 0.0
    %v333 = vmax.f32 %v302, 0.0
    %v334 = vmax.f32 %v305, 0.0
    %v335 = vmax.f32 %v308, 0.0
    %v336 = vmax.f32 %v311, 0.0
    %v337 = vmax.f32 %v314, 0.0
    %v338 = vmax.f32 %v317, 0.0
    %v339 = vmax.f32 %v320, 0.0
    %v340 = vmax.f32 %v323, 0.0
    %v341 = vld [vmem:[%s3] sm:$0xff]
    %v342 = vld [vmem:[%s3 + $0x8] sm:$0xff]
    %v343 = vld [vmem:[%s3 + $0x10] sm:$0xff]
    %v344 = vld [vmem:[%s3 + $0x18] sm:$0xff]
    %v345 = vld [vmem:[%s3 + $0x20] sm:$0xff]
    %v346 = vld [vmem:[%s3 + $0x28] sm:$0xff]
    %v347 = vld [vmem:[%s3 + $0x30] sm:$0xff]
    %v348 = vld [vmem:[%s3 + $0x38] sm:$0xff]
    %v349 = vld [vmem:[%s3 + $0x40] sm:$0xff]
    %v350 = vld [vmem:[%s3 + $0x48] sm:$0xff]
    %v351 = vld [vmem:[%s3 + $0x50] sm:$0xff]
    %v352 = vld [vmem:[%s3 + $0x58] sm:$0xff]
    %v353 = vld [vmem:[%s3 + $0x60] sm:$0xff]
    %v354 = vld [vmem:[%s3 + $0x68] sm:$0xff]
    %v355 = vld [vmem:[%s3 + $0x70] sm:$0xff]
    %v356 = vld [vmem:[%s3 + $0x78] sm:$0xff]
    %v357 = vld [vmem:[%s4] sm:$0xff]
    %v358 = vld [vmem:[%s4 + $0x8] sm:$0xff]
    %v359 = vld [vmem:[%s4 + $0x10] sm:$0xff]
    %v360 = vld [vmem:[%s4 + $0x18] sm:$0xff]
    %v361 = vld [vmem:[%s4 + $0x20] sm:$0xff]
    %v362 = vld [vmem:[%s4 + $0x28] sm:$0xff]
    %v363 = vld [vmem:[%s4 + $0x30] sm:$0xff]
    %v364 = vld [vmem:[%s4 + $0x38] sm:$0xff]
    %v365 = vld [vmem:[%s4 + $0x40] sm:$0xff]
    %v366 = vld [vmem:[%s4 + $0x48] sm:$0xff]
    %v367 = vld [vmem:[%s4 + $0x50] sm:$0xff]
    %v368 = vld [vmem:[%s4 + $0x58] sm:$0xff]
    %v369 = vld [vmem:[%s4 + $0x60] sm:$0xff]
    %v370 = vld [vmem:[%s4 + $0x68] sm:$0xff]
    %v371 = vld [vmem:[%s4 + $0x70] sm:$0xff]
    %v372 = vld [vmem:[%s4 + $0x78] sm:$0xff]
    %374 = vset.pattern.permute.xlu0 0
    %375 = vperm.xlu0 %374, %v357
    %v376 = vpop.permute.xlu0 %375
    %379 = vset.pattern.permute.xlu0 0
    %380 = vperm.xlu0 %379, %v358
    %v381 = vpop.permute.xlu0 %380
    %384 = vset.pattern.permute.xlu0 0
    %385 = vperm.xlu0 %384, %v359
    %v386 = vpop.permute.xlu0 %385
    %389 = vset.pattern.permute.xlu0 0
    %390 = vperm.xlu0 %389, %v360
    %v391 = vpop.permute.xlu0 %390
    %394 = vset.pattern.permute.xlu0 0
    %395 = vperm.xlu0 %394, %v361
    %v396 = vpop.permute.xlu0 %395
    %399 = vset.pattern.permute.xlu0 0
    %400 = vperm.xlu0 %399, %v362
    %v401 = vpop.permute.xlu0 %400
    %404 = vset.pattern.permute.xlu0 0
    %405 = vperm.xlu0 %404, %v363
    %v406 = vpop.permute.xlu0 %405
    %409 = vset.pattern.permute.xlu0 0
    %410 = vperm.xlu0 %409, %v364
    %v411 = vpop.permute.xlu0 %410
    %414 = vset.pattern.permute.xlu0 0
    %415 = vperm.xlu0 %414, %v365
    %v416 = vpop.permute.xlu0 %415
    %419 = vset.pattern.permute.xlu0 0
    %420 = vperm.xlu0 %419, %v366
    %v421 = vpop.permute.xlu0 %420
    %424 = vset.pattern.permute.xlu0 0
    %425 = vperm.xlu0 %424, %v367
    %v426 = vpop.permute.xlu0 %425
    %429 = vset.pattern.permute.xlu0 0
    %430 = vperm.xlu0 %429, %v368
    %v431 = vpop.permute.xlu0 %430
    %434 = vset.pattern.permute.xlu0 0
    %435 = vperm.xlu0 %434, %v369
    %v436 = vpop.permute.xlu0 %435
    %439 = vset.pattern.permute.xlu0 0
    %440 = vperm.xlu0 %439, %v370
    %v441 = vpop.permute.xlu0 %440
    %444 = vset.pattern.permute.xlu0 0
    %445 = vperm.xlu0 %444, %v371
    %v446 = vpop.permute.xlu0 %445
    %449 = vset.pattern.permute.xlu0 0
    %450 = vperm.xlu0 %449, %v372
    %v451 = vpop.permute.xlu0 %450
    %453 = vmatpush.msra.mxu0 %v340
    %454 = vmatpush.msra.mxu0 %v339
    %455 = vmatpush.msra.mxu0 %v338
    %456 = vmatpush.msra.mxu0 %v337
    %457 = vmatpush.msra.mxu0 %v336
    %458 = vmatpush.msra.mxu0 %v335
    %459 = vmatpush.msra.mxu0 %v334
    %460 = vmatpush.msra.mxu0 %v333
    %461 = vmatpush.msra.mxu0 %v332
    %462 = vmatpush.msra.mxu0 %v331
    %463 = vmatpush.msra.mxu0 %v330
    %464 = vmatpush.msra.mxu0 %v329
    %465 = vmatpush.msra.mxu0 %v328
    %466 = vmatpush.msra.mxu0 %v327
    %467 = vmatpush.msra.mxu0 %v326
    %468 = vmatpush.msra.mxu0 %v325
    %469 = vmatmul.f32.gmra.mxu0 %v341
    %v470 = vpop.f32.mrf.mxu0
    %v471 = vadd.f32 %v376, %v470
    %472 = vmatmul.f32.gmra.mxu0 %v342
    %v473 = vpop.f32.mrf.mxu0
    %v474 = vadd.f32 %v381, %v473
    %475 = vmatmul.f32.gmra.mxu0 %v343
    %v476 = vpop.f32.mrf.mxu0
    %v477 = vadd.f32 %v386, %v476
    %478 = vmatmul.f32.gmra.mxu0 %v344
    %v479 = vpop.f32.mrf.mxu0
    %v480 = vadd.f32 %v391, %v479
    %481 = vmatmul.f32.gmra.mxu0 %v345
    %v482 = vpop.f32.mrf.mxu0
    %v483 = vadd.f32 %v396, %v482
    %484 = vmatmul.f32.gmra.mxu0 %v346
    %v485 = vpop.f32.mrf.mxu0
    %v486 = vadd.f32 %v401, %v485
    %487 = vmatmul.f32.gmra.mxu0 %v347
    %v488 = vpop.f32.mrf.mxu0
    %v489 = vadd.f32 %v406, %v488
    %490 = vmatmul.f32.gmra.mxu0 %v348
    %v491 = vpop.f32.mrf.mxu0
    %v492 = vadd.f32 %v411, %v491
    %493 = vmatmul.f32.gmra.mxu0 %v349
    %v494 = vpop.f32.mrf.mxu0
    %v495 = vadd.f32 %v416, %v494
    %496 = vmatmul.f32.gmra.mxu0 %v350
    %v497 = vpop.f32.mrf.mxu0
    %v498 = vadd.f32 %v421, %v497
    %499 = vmatmul.f32.gmra.mxu0 %v351
    %v500 = vpop.f32.mrf.mxu0
    %v501 = vadd.f32 %v426, %v500
    %502 = vmatmul.f32.gmra.mxu0 %v352
    %v503 = vpop.f32.mrf.mxu0
    %v504 = vadd.f32 %v431, %v503
    %505 = vmatmul.f32.gmra.mxu0 %v353
    %v506 = vpop.f32.mrf.mxu0
    %v507 = vadd.f32 %v436, %v506
    %508 = vmatmul.f32.gmra.mxu0 %v354
    %v509 = vpop.f32.mrf.mxu0
    %v510 = vadd.f32 %v441, %v509
    %511 = vmatmul.f32.gmra.mxu0 %v355
    %v512 = vpop.f32.mrf.mxu0
    %v513 = vadd.f32 %v446, %v512
    %514 = vmatmul.f32.gmra.mxu0 %v356
    %v515 = vpop.f32.mrf.mxu0
    %v516 = vadd.f32 %v451, %v515
    %517 = vdwg.mxu0
    %v518 = vmax.f32 %v471, 0.0
    %v519 = vmax.f32 %v474, 0.0
    %v520 = vmax.f32 %v477, 0.0
    %v521 = vmax.f32 %v480, 0.0
    %v522 = vmax.f32 %v483, 0.0
    %v523 = vmax.f32 %v486, 0.0
    %v524 = vmax.f32 %v489, 0.0
    %v525 = vmax.f32 %v492, 0.0
    %v526 = vmax.f32 %v495, 0.0
    %v527 = vmax.f32 %v498, 0.0
    %v528 = vmax.f32 %v501, 0.0
    %v529 = vmax.f32 %v504, 0.0
    %v530 = vmax.f32 %v507, 0.0
    %v531 = vmax.f32 %v510, 0.0
    %v532 = vmax.f32 %v513, 0.0
    %v533 = vmax.f32 %v516, 0.0
    %v534 = vld [vmem:[%s5] sm:$0xff]
    %v535 = vld [vmem:[%s5 + $0x8] sm:$0xff]
    %v536 = vld [vmem:[%s5 + $0x10] sm:$0xff]
    %v537 = vld [vmem:[%s5 + $0x18] sm:$0xff]
    %v538 = vld [vmem:[%s5 + $0x20] sm:$0xff]
    %v539 = vld [vmem:[%s5 + $0x28] sm:$0xff]
    %v540 = vld [vmem:[%s5 + $0x30] sm:$0xff]
    %v541 = vld [vmem:[%s5 + $0x38] sm:$0xff]
    %v542 = vld [vmem:[%s5 + $0x40] sm:$0xff]
    %v543 = vld [vmem:[%s5 + $0x48] sm:$0xff]
    %v544 = vld [vmem:[%s5 + $0x50] sm:$0xff]
    %v545 = vld [vmem:[%s5 + $0x58] sm:$0xff]
    %v546 = vld [vmem:[%s5 + $0x60] sm:$0xff]
    %v547 = vld [vmem:[%s5 + $0x68] sm:$0xff]
    %v548 = vld [vmem:[%s5 + $0x70] sm:$0xff]
    %v549 = vld [vmem:[%s5 + $0x78] sm:$0xff]
    %v550 = vld [vmem:[%s6] sm:$0xff]
    %v551 = vld [vmem:[%s6 + $0x8] sm:$0xff]
    %v552 = vld [vmem:[%s6 + $0x10] sm:$0xff]
    %v553 = vld [vmem:[%s6 + $0x18] sm:$0xff]
    %v554 = vld [vmem:[%s6 + $0x20] sm:$0xff]
    %v555 = vld [vmem:[%s6 + $0x28] sm:$0xff]
    %v556 = vld [vmem:[%s6 + $0x30] sm:$0xff]
    %v557 = vld [vmem:[%s6 + $0x38] sm:$0xff]
    %v558 = vld [vmem:[%s6 + $0x40] sm:$0xff]
    %v559 = vld [vmem:[%s6 + $0x48] sm:$0xff]
    %v560 = vld [vmem:[%s6 + $0x50] sm:$0xff]
    %v561 = vld [vmem:[%s6 + $0x58] sm:$0xff]
    %v562 = vld [vmem:[%s6 + $0x60] sm:$0xff]
    %v563 = vld [vmem:[%s6 + $0x68] sm:$0xff]
    %v564 = vld [vmem:[%s6 + $0x70] sm:$0xff]
    %v565 = vld [vmem:[%s6 + $0x78] sm:$0xff]
    %567 = vset.pattern.permute.xlu0 0
    %568 = vperm.xlu0 %567, %v550
    %v569 = vpop.permute.xlu0 %568
    %572 = vset.pattern.permute.xlu0 0
    %573 = vperm.xlu0 %572, %v551
    %v574 = vpop.permute.xlu0 %573
    %577 = vset.pattern.permute.xlu0 0
    %578 = vperm.xlu0 %577, %v552
    %v579 = vpop.permute.xlu0 %578
    %582 = vset.pattern.permute.xlu0 0
    %583 = vperm.xlu0 %582, %v553
    %v584 = vpop.permute.xlu0 %583
    %587 = vset.pattern.permute.xlu0 0
    %588 = vperm.xlu0 %587, %v554
    %v589 = vpop.permute.xlu0 %588
    %592 = vset.pattern.permute.xlu0 0
    %593 = vperm.xlu0 %592, %v555
    %v594 = vpop.permute.xlu0 %593
    %597 = vset.pattern.permute.xlu0 0
    %598 = vperm.xlu0 %597, %v556
    %v599 = vpop.permute.xlu0 %598
    %602 = vset.pattern.permute.xlu0 0
    %603 = vperm.xlu0 %602, %v557
    %v604 = vpop.permute.xlu0 %603
    %607 = vset.pattern.permute.xlu0 0
    %608 = vperm.xlu0 %607, %v558
    %v609 = vpop.permute.xlu0 %608
    %612 = vset.pattern.permute.xlu0 0
    %613 = vperm.xlu0 %612, %v559
    %v614 = vpop.permute.xlu0 %613
    %617 = vset.pattern.permute.xlu0 0
    %618 = vperm.xlu0 %617, %v560
    %v619 = vpop.permute.xlu0 %618
    %622 = vset.pattern.permute.xlu0 0
    %623 = vperm.xlu0 %622, %v561
    %v624 = vpop.permute.xlu0 %623
    %627 = vset.pattern.permute.xlu0 0
    %628 = vperm.xlu0 %627, %v562
    %v629 = vpop.permute.xlu0 %628
    %632 = vset.pattern.permute.xlu0 0
    %633 = vperm.xlu0 %632, %v563
    %v634 = vpop.permute.xlu0 %633
    %637 = vset.pattern.permute.xlu0 0
    %638 = vperm.xlu0 %637, %v564
    %v639 = vpop.permute.xlu0 %638
    %642 = vset.pattern.permute.xlu0 0
    %643 = vperm.xlu0 %642, %v565
    %v644 = vpop.permute.xlu0 %643
    %646 = vmatpush.msra.mxu0 %v533
    %647 = vmatpush.msra.mxu0 %v532
    %648 = vmatpush.msra.mxu0 %v531
    %649 = vmatpush.msra.mxu0 %v530
    %650 = vmatpush.msra.mxu0 %v529
    %651 = vmatpush.msra.mxu0 %v528
    %652 = vmatpush.msra.mxu0 %v527
    %653 = vmatpush.msra.mxu0 %v526
    %654 = vmatpush.msra.mxu0 %v525
    %655 = vmatpush.msra.mxu0 %v524
    %656 = vmatpush.msra.mxu0 %v523
    %657 = vmatpush.msra.mxu0 %v522
    %658 = vmatpush.msra.mxu0 %v521
    %659 = vmatpush.msra.mxu0 %v520
    %660 = vmatpush.msra.mxu0 %v519
    %661 = vmatpush.msra.mxu0 %v518
    %662 = vmatmul.f32.gmra.mxu0 %v534
    %v663 = vpop.f32.mrf.mxu0
    %v664 = vadd.f32 %v569, %v663
    %665 = vmatmul.f32.gmra.mxu0 %v535
    %v666 = vpop.f32.mrf.mxu0
    %v667 = vadd.f32 %v574, %v666
    %668 = vmatmul.f32.gmra.mxu0 %v536
    %v669 = vpop.f32.mrf.mxu0
    %v670 = vadd.f32 %v579, %v669
    %671 = vmatmul.f32.gmra.mxu0 %v537
    %v672 = vpop.f32.mrf.mxu0
    %v673 = vadd.f32 %v584, %v672
    %674 = vmatmul.f32.gmra.mxu0 %v538
    %v675 = vpop.f32.mrf.mxu0
    %v676 = vadd.f32 %v589, %v675
    %677 = vmatmul.f32.gmra.mxu0 %v539
    %v678 = vpop.f32.mrf.mxu0
    %v679 = vadd.f32 %v594, %v678
    %680 = vmatmul.f32.gmra.mxu0 %v540
    %v681 = vpop.f32.mrf.mxu0
    %v682 = vadd.f32 %v599, %v681
    %683 = vmatmul.f32.gmra.mxu0 %v541
    %v684 = vpop.f32.mrf.mxu0
    %v685 = vadd.f32 %v604, %v684
    %686 = vmatmul.f32.gmra.mxu0 %v542
    %v687 = vpop.f32.mrf.mxu0
    %v688 = vadd.f32 %v609, %v687
    %689 = vmatmul.f32.gmra.mxu0 %v543
    %v690 = vpop.f32.mrf.mxu0
    %v691 = vadd.f32 %v614, %v690
    %692 = vmatmul.f32.gmra.mxu0 %v544
    %v693 = vpop.f32.mrf.mxu0
    %v694 = vadd.f32 %v619, %v693
    %695 = vmatmul.f32.gmra.mxu0 %v545
    %v696 = vpop.f32.mrf.mxu0
    %v697 = vadd.f32 %v624, %v696
    %698 = vmatmul.f32.gmra.mxu0 %v546
    %v699 = vpop.f32.mrf.mxu0
    %v700 = vadd.f32 %v629, %v699
    %701 = vmatmul.f32.gmra.mxu0 %v547
    %v702 = vpop.f32.mrf.mxu0
    %v703 = vadd.f32 %v634, %v702
    %704 = vmatmul.f32.gmra.mxu0 %v548
    %v705 = vpop.f32.mrf.mxu0
    %v706 = vadd.f32 %v639, %v705
    %707 = vmatmul.f32.gmra.mxu0 %v549
    %v708 = vpop.f32.mrf.mxu0
    %v709 = vadd.f32 %v644, %v708
    %710 = vdwg.mxu0
    %v711 = vmax.f32 %v664, 0.0
    %v712 = vmax.f32 %v667, 0.0
    %v713 = vmax.f32 %v670, 0.0
    %v714 = vmax.f32 %v673, 0.0
    %v715 = vmax.f32 %v676, 0.0
    %v716 = vmax.f32 %v679, 0.0
    %v717 = vmax.f32 %v682, 0.0
    %v718 = vmax.f32 %v685, 0.0
    %v719 = vmax.f32 %v688, 0.0
    %v720 = vmax.f32 %v691, 0.0
    %v721 = vmax.f32 %v694, 0.0
    %v722 = vmax.f32 %v697, 0.0
    %v723 = vmax.f32 %v700, 0.0
    %v724 = vmax.f32 %v703, 0.0
    %v725 = vmax.f32 %v706, 0.0
    %v726 = vmax.f32 %v709, 0.0
    %v727 = vld [vmem:[%s7] sm:$0xff]
    %v728 = vld [vmem:[%s7 + $0x8] sm:$0xff]
    %v729 = vld [vmem:[%s7 + $0x10] sm:$0xff]
    %v730 = vld [vmem:[%s7 + $0x18] sm:$0xff]
    %v731 = vld [vmem:[%s7 + $0x20] sm:$0xff]
    %v732 = vld [vmem:[%s7 + $0x28] sm:$0xff]
    %v733 = vld [vmem:[%s7 + $0x30] sm:$0xff]
    %v734 = vld [vmem:[%s7 + $0x38] sm:$0xff]
    %v735 = vld [vmem:[%s7 + $0x40] sm:$0xff]
    %v736 = vld [vmem:[%s7 + $0x48] sm:$0xff]
    %v737 = vld [vmem:[%s7 + $0x50] sm:$0xff]
    %v738 = vld [vmem:[%s7 + $0x58] sm:$0xff]
    %v739 = vld [vmem:[%s7 + $0x60] sm:$0xff]
    %v740 = vld [vmem:[%s7 + $0x68] sm:$0xff]
    %v741 = vld [vmem:[%s7 + $0x70] sm:$0xff]
    %v742 = vld [vmem:[%s7 + $0x78] sm:$0xff]
    %744 = vset.pattern.permute.xlu0 0
    %745 = vperm.xlu0 %744, %v727
    %v746 = vpop.permute.xlu0 %745
    %749 = vset.pattern.permute.xlu0 0
    %750 = vperm.xlu0 %749, %v728
    %v751 = vpop.permute.xlu0 %750
    %754 = vset.pattern.permute.xlu0 0
    %755 = vperm.xlu0 %754, %v729
    %v756 = vpop.permute.xlu0 %755
    %759 = vset.pattern.permute.xlu0 0
    %760 = vperm.xlu0 %759, %v730
    %v761 = vpop.permute.xlu0 %760
    %764 = vset.pattern.permute.xlu0 0
    %765 = vperm.xlu0 %764, %v731
    %v766 = vpop.permute.xlu0 %765
    %769 = vset.pattern.permute.xlu0 0
    %770 = vperm.xlu0 %769, %v732
    %v771 = vpop.permute.xlu0 %770
    %774 = vset.pattern.permute.xlu0 0
    %775 = vperm.xlu0 %774, %v733
    %v776 = vpop.permute.xlu0 %775
    %779 = vset.pattern.permute.xlu0 0
    %780 = vperm.xlu0 %779, %v734
    %v781 = vpop.permute.xlu0 %780
    %784 = vset.pattern.permute.xlu0 0
    %785 = vperm.xlu0 %784, %v735
    %v786 = vpop.permute.xlu0 %785
    %789 = vset.pattern.permute.xlu0 0
    %790 = vperm.xlu0 %789, %v736
    %v791 = vpop.permute.xlu0 %790
    %794 = vset.pattern.permute.xlu0 0
    %795 = vperm.xlu0 %794, %v737
    %v796 = vpop.permute.xlu0 %795
    %799 = vset.pattern.permute.xlu0 0
    %800 = vperm.xlu0 %799, %v738
    %v801 = vpop.permute.xlu0 %800
    %804 = vset.pattern.permute.xlu0 0
    %805 = vperm.xlu0 %804, %v739
    %v806 = vpop.permute.xlu0 %805
    %809 = vset.pattern.permute.xlu0 0
    %810 = vperm.xlu0 %809, %v740
    %v811 = vpop.permute.xlu0 %810
    %814 = vset.pattern.permute.xlu0 0
    %815 = vperm.xlu0 %814, %v741
    %v816 = vpop.permute.xlu0 %815
    %819 = vset.pattern.permute.xlu0 0
    %820 = vperm.xlu0 %819, %v742
    %v821 = vpop.permute.xlu0 %820
    %v823 = vmul.f32 %v711, %v746
    %v824 = vmul.f32 %v712, %v751
    %v825 = vmul.f32 %v713, %v756
    %v826 = vmul.f32 %v714, %v761
    %v827 = vmul.f32 %v715, %v766
    %v828 = vmul.f32 %v716, %v771
    %v829 = vmul.f32 %v717, %v776
    %v830 = vmul.f32 %v718, %v781
    %v831 = vmul.f32 %v719, %v786
    %v832 = vmul.f32 %v720, %v791
    %v833 = vmul.f32 %v721, %v796
    %v834 = vmul.f32 %v722, %v801
    %v835 = vmul.f32 %v723, %v806
    %v836 = vmul.f32 %v724, %v811
    %v837 = vmul.f32 %v725, %v816
    %v838 = vmul.f32 %v726, %v821
    %v839 = vadd.f32 %v823, %v824
    %v840 = vadd.f32 %v839, %v825
    %v841 = vadd.f32 %v840, %v826
    %v842 = vadd.f32 %v841, %v827
    %v843 = vadd.f32 %v842, %v828
    %v844 = vadd.f32 %v843, %v829
    %v845 = vadd.f32 %v844, %v830
    %v846 = vadd.f32 %v845, %v831
    %v847 = vadd.f32 %v846, %v832
    %v848 = vadd.f32 %v847, %v833
    %v849 = vadd.f32 %v848, %v834
    %v850 = vadd.f32 %v849, %v835
    %v851 = vadd.f32 %v850, %v836
    %v852 = vadd.f32 %v851, %v837
    %v853 = vadd.f32 %v852, %v838
    %v854 = vrot.slane %v853, 4
    %v855 = vadd.f32 %v853, %v854
    %v856 = vrot.slane %v855, 2
    %v857 = vadd.f32 %v855, %v856
    %v858 = vrot.slane %v857, 1
    %v859 = vadd.f32 %v857, %v858
    %v860 = vld [vmem:[#allocation2] sm:$0x1]
    %862 = vset.pattern.permute.xlu0 0
    %863 = vperm.xlu0 %862, %v860
    %v864 = vpop.permute.xlu0 %863
    %v866 = vperm.slane %v864, 0
    %v867 = vadd.f32 %v859, %v866
    %868 = vst [vmem:[#allocation3] sm:$0x1] %v867
    // Predicated region
    $region38: #{tpu_custom_call.1} parent=1 // pred_check
      _
    $region39: #{tpu_custom_call.1} parent=1 // pred_check_branch
      %870 = sbr.rel (0) target = $region41
    $region40: #{tpu_custom_call.1} parent=1 // pred_region
      %872 = vsyncadd [#allocation4], 0
      %s874 = sshll.u32 [#allocation3], 4
      %s875 = int_to_ptr.vmem [resolvable:$true] %s874
      %s876 = sshll.u32 %s9, 4
      %s877 = int_to_ptr.hbm [resolvable:$true] %s876
      %879 = dma.vmem_to_hbm [thread:$0]  %s875, 16, %s877, [#allocation4]
    $region41: #{tpu_custom_call.1} parent=1 // pred_fallthru
      _
    // Predicated region
    $region42: #{tpu_custom_call.1} parent=1 // pred_check
      _
    $region43: #{tpu_custom_call.1} parent=1 // pred_check_branch
      %881 = sbr.rel (0) target = $region45
    $region44: #{tpu_custom_call.1} parent=1 // pred_region
      %883 = dma.done [#allocation4], 16
    $region45: #{tpu_custom_call.1} parent=1 // pred_fallthru
      _
    %884 = vsyncpa [#allocation4], 1

</llo_original>
